<compile_context>
chip_gen: v5e
topology: v5e:2x2
jax: 0.10.0
libtpu: 0.0.40
codegen_flags: <defaults>
</compile_context>

<pallas_src>
import jax
import jax.numpy as jnp
from jax.experimental import pallas as pl
from jax.experimental.pallas import tpu as pltpu


def _conv3x3_bf16(p, w_ref, Hp, Wp):
    """'Same' 3x3 conv: p:(Hp, Wp, C) bf16, w_ref:(3, 3*C, Co) bf16 -> (Hp*Wp, Co) f32.

    kw taps are folded into the contraction dim (K = 3*C, order [j-1, j, j+1]).
    kh taps: one zero row (Wp positions) is prepended/appended, so each of the
    three kh matmuls covers the full output range; results are summed once
    (no ranged read-modify-write accumulation).
    """
    C = p.shape[-1]
    zrow = jnp.zeros((1, Wp, C), p.dtype)
    pp = jnp.concatenate([zrow, p, zrow], axis=0)                 # (Hp+2, Wp, C)
    zcol = jnp.zeros((Hp + 2, 1, C), p.dtype)
    left = jnp.concatenate([zcol, pp[:, : Wp - 1, :]], axis=1)    # value at j-1
    right = jnp.concatenate([pp[:, 1:, :], zcol], axis=1)         # value at j+1
    x2 = jnp.concatenate([left, pp, right], axis=-1)              # (Hp+2, Wp, 3C)
    x2 = x2.reshape((Hp + 2) * Wp, 3 * C)

    dn = (((1,), (0,)), ((), ()))
    M = Hp * Wp
    # Output row i uses padded rows i (kh=0), i+1 (kh=1), i+2 (kh=2).
    d0 = jax.lax.dot_general(x2[0:M], w_ref[0], dn,
                             preferred_element_type=jnp.float32)
    d1 = jax.lax.dot_general(x2[Wp:Wp + M], w_ref[1], dn,
                             preferred_element_type=jnp.float32)
    d2 = jax.lax.dot_general(x2[2 * Wp:2 * Wp + M], w_ref[2], dn,
                             preferred_element_type=jnp.float32)
    return d0 + d1 + d2


def _down_kernel(x_ref, w1_ref, s1_ref, b1_ref, w2_ref, s2_ref, b2_ref, o_ref):
    # x_ref  : (Bt, H, W, Cin)   bf16 (batch tile of images)
    # w1_ref : (3, 3*Cin, Cmid)  bf16 (raw conv weights, kw folded into K)
    # s1_ref : (1, Cmid)         f32  BN1 scale (gamma / sqrt(var + eps))
    # b1_ref : (1, Cmid)         f32  folded conv+BN1 bias
    # w2_ref : (3, 3*Cmid, Cout) bf16
    # s2_ref : (1, Cout)         f32
    # b2_ref : (1, Cout)         f32
    # o_ref  : (Bt, Hp, Wp, Cout)
    Bt, H, W, Cin = x_ref.shape
    Hp, Wp = H // 2, W // 2
    Cmid = w1_ref.shape[-1]
    Cout = w2_ref.shape[-1]

    for b in range(Bt):                                   # static unroll
        # ---- fused MaxPool2d(2), in registers (no staging scratch) ----
        x = x_ref[b]                                      # (H, W, Cin) bf16
        xr = x.reshape(Hp, 2, W, Cin)
        rowmax = jnp.maximum(xr[:, 0], xr[:, 1])          # (Hp, W, Cin)
        cm = rowmax.reshape(Hp, Wp, 2, Cin)
        p = jnp.maximum(cm[:, :, 0, :], cm[:, :, 1, :])   # (Hp, Wp, Cin) bf16

        # ---- conv1 -> BN1 (scale in f32) -> ReLU ----
        d = _conv3x3_bf16(p, w1_ref, Hp, Wp)              # (Hp*Wp, Cmid) f32
        h = jnp.maximum(d * s1_ref[...] + b1_ref[...], 0.0)
        h = h.astype(jnp.bfloat16).reshape(Hp, Wp, Cmid)

        # ---- conv2 -> BN2 -> ReLU ----
        d = _conv3x3_bf16(h, w2_ref, Hp, Wp)              # (Hp*Wp, Cout) f32
        out = jnp.maximum(d * s2_ref[...] + b2_ref[...], 0.0)
        o_ref[b] = out.reshape(Hp, Wp, Cout).astype(o_ref.dtype)


def down_forward_nhwc(x_nhwc, w1, b1, g1, be1, m1, v1, w2, b2, g2, be2, m2, v2,
                      eps=1e-5, out_dtype=jnp.float32, batch_tile=1):
    """Down forward, NHWC activations. x_nhwc: (N, H, W, Cin), H and W even."""
    N, H, W, Cin = x_nhwc.shape
    Cmid = w1.shape[0]
    Cout = w2.shape[0]
    assert H % 2 == 0 and W % 2 == 0 and H >= 2 and W >= 4, (H, W)
    assert N % batch_tile == 0, (N, batch_tile)
    Hp, Wp = H // 2, W // 2
    Bt = batch_tile

    # Eval-mode BN folding: per-channel scale stays in f32 (applied on the f32
    # accumulator inside the kernel), bias folded; conv weights stay unscaled bf16.
    s1 = (g1 / jnp.sqrt(v1 + eps)).astype(jnp.float32)
    b1f = ((b1 - m1) * s1 + be1).astype(jnp.float32)
    s2 = (g2 / jnp.sqrt(v2 + eps)).astype(jnp.float32)
    b2f = ((b2 - m2) * s2 + be2).astype(jnp.float32)

    # OIHW -> (kh, kw*Cin, Co): kw folded into the contraction dim; bf16 for the MXU.
    w1cat = jnp.transpose(w1, (2, 3, 1, 0)).reshape(3, 3 * Cin, Cmid).astype(jnp.bfloat16)
    w2cat = jnp.transpose(w2, (2, 3, 1, 0)).reshape(3, 3 * Cmid, Cout).astype(jnp.bfloat16)

    x_bf16 = x_nhwc.astype(jnp.bfloat16)   # halve input HBM traffic and VMEM tiles

    # VMEM budget ~ half of physical per-core VMEM (32 MiB v7x, 64 MiB v5e/v6e).
    try:
        vmem_cap = int(pltpu.get_tpu_info().vmem_capacity_bytes)
    except Exception:
        vmem_cap = 64 * 1024 * 1024        # conservative fallback
    vmem_limit = int(min(vmem_cap // 2, 64 * 1024 * 1024))

    out_itemsize = jnp.dtype(out_dtype).itemsize
    flops = 2 * N * Hp * Wp * 9 * (Cin * Cmid + Cmid * Cout)
    bytes_accessed = (2 * N * H * W * Cin
                      + 2 * (9 * Cin * Cmid + 9 * Cmid * Cout)
                      + 4 * 2 * (Cmid + Cout)
                      + out_itemsize * N * Hp * Wp * Cout)

    return pl.pallas_call(
        _down_kernel,
        out_shape=jax.ShapeDtypeStruct((N, Hp, Wp, Cout), out_dtype),
        grid=(N // Bt,),
        in_specs=[
            pl.BlockSpec((Bt, H, W, Cin), lambda n: (n, 0, 0, 0)),
            pl.BlockSpec((3, 3 * Cin, Cmid), lambda n: (0, 0, 0)),
            pl.BlockSpec((1, Cmid), lambda n: (0, 0)),
            pl.BlockSpec((1, Cmid), lambda n: (0, 0)),
            pl.BlockSpec((3, 3 * Cmid, Cout), lambda n: (0, 0, 0)),
            pl.BlockSpec((1, Cout), lambda n: (0, 0)),
            pl.BlockSpec((1, Cout), lambda n: (0, 0)),
        ],
        out_specs=pl.BlockSpec((Bt, Hp, Wp, Cout), lambda n: (n, 0, 0, 0)),
        compiler_params=pltpu.CompilerParams(
            dimension_semantics=("parallel",),
            vmem_limit_bytes=vmem_limit,
        ),
        cost_estimate=pl.CostEstimate(flops=int(flops), transcendentals=0,
                                      bytes_accessed=int(bytes_accessed)),
    )(x_bf16, w1cat, s1.reshape(1, Cmid), b1f.reshape(1, Cmid),
      w2cat, s2.reshape(1, Cout), b2f.reshape(1, Cout))


def down_forward(x_nchw, w1, b1, g1, be1, m1, v1, w2, b2, g2, be2, m2, v2,
                 eps=1e-5, out_dtype=jnp.float32, batch_tile=1):
    """PyTorch-layout entry point. x_nchw: (N, Cin, H, W).

    Note: each NCHW<->NHWC transpose is a full HBM pass; prefer keeping
    activations NHWC across layers and calling down_forward_nhwc directly.
    """
    x_nhwc = jnp.transpose(x_nchw, (0, 2, 3, 1))
    out_nhwc = down_forward_nhwc(x_nhwc, w1, b1, g1, be1, m1, v1,
                                 w2, b2, g2, be2, m2, v2,
                                 eps=eps, out_dtype=out_dtype,
                                 batch_tile=batch_tile)
    return jnp.transpose(out_nhwc, (0, 3, 1, 2))


def _ref_forward(x, w1, b1, g1, be1, m1, v1, w2, b2, g2, be2, m2, v2, eps=1e-5):
    """Pure-JAX f32 reference matching the PyTorch module (eval-mode BN)."""
    N, C, H, W = x.shape
    y = x.reshape(N, C, H // 2, 2, W // 2, 2).max(axis=(3, 5))   # MaxPool2d(2)
    dn = ('NCHW', 'OIHW', 'NCHW')

    def bn(t, g, be, m, v):
        return ((t - m.reshape(1, -1, 1, 1)) / jnp.sqrt(v.reshape(1, -1, 1, 1) + eps)
                * g.reshape(1, -1, 1, 1) + be.reshape(1, -1, 1, 1))

    y = jax.lax.conv_general_dilated(y, w1, (1, 1), 'SAME', dimension_numbers=dn)
    y = jnp.maximum(bn(y + b1.reshape(1, -1, 1, 1), g1, be1, m1, v1), 0.0)
    y = jax.lax.conv_general_dilated(y, w2, (1, 1), 'SAME', dimension_numbers=dn)
    y = jnp.maximum(bn(y + b2.reshape(1, -1, 1, 1), g2, be2, m2, v2), 0.0)
    return y


if __name__ == "__main__":
    key = jax.random.PRNGKey(0)
    N, Cin, Cout, H, W = 2, 4, 8, 16, 16
    ks = jax.random.split(key, 13)

    x = jax.random.normal(ks[0], (N, Cin, H, W), dtype=jnp.float32)

    # Conv params: PyTorch-like uniform(-1/sqrt(fan_in), 1/sqrt(fan_in)).
    fan1 = Cin * 9
    bound1 = 1.0 / (fan1 ** 0.5)
    w1 = jax.random.uniform(ks[1], (Cout, Cin, 3, 3), jnp.float32, -bound1, bound1)
    b1 = jax.random.uniform(ks[2], (Cout,), jnp.float32, -bound1, bound1)
    fan2 = Cout * 9
    bound2 = 1.0 / (fan2 ** 0.5)
    w2 = jax.random.uniform(ks[3], (Cout, Cout, 3, 3), jnp.float32, -bound2, bound2)
    b2 = jax.random.uniform(ks[4], (Cout,), jnp.float32, -bound2, bound2)

    # BatchNorm params / running stats (non-trivial so BN folding is exercised).
    g1 = jax.random.uniform(ks[5], (Cout,), jnp.float32, 0.5, 1.5)
    be1 = jax.random.uniform(ks[6], (Cout,), jnp.float32, -0.5, 0.5)
    m1 = jax.random.uniform(ks[7], (Cout,), jnp.float32, -0.5, 0.5)
    v1 = jax.random.uniform(ks[8], (Cout,), jnp.float32, 0.5, 1.5)
    g2 = jax.random.uniform(ks[9], (Cout,), jnp.float32, 0.5, 1.5)
    be2 = jax.random.uniform(ks[10], (Cout,), jnp.float32, -0.5, 0.5)
    m2 = jax.random.uniform(ks[11], (Cout,), jnp.float32, -0.5, 0.5)
    v2 = jax.random.uniform(ks[12], (Cout,), jnp.float32, 0.5, 1.5)

    out = down_forward(x, w1, b1, g1, be1, m1, v1, w2, b2, g2, be2, m2, v2)
    out = jax.block_until_ready(out)

    ref = jax.block_until_ready(
        _ref_forward(x, w1, b1, g1, be1, m1, v1, w2, b2, g2, be2, m2, v2))

    assert out.shape == (N, Cout, H // 2, W // 2), out.shape
    max_err = float(jnp.max(jnp.abs(out - ref)))
    # bf16 activations/weights with f32 accumulation -> loose-ish tolerance.
    assert jnp.allclose(out, ref, atol=1e-1, rtol=1e-1), max_err

    print("KERNEL_OK")
</pallas_src>

<mosaic_0001>
module attributes {stable_mosaic.version = 11 : i64} {
  func.func @_down_kernel(%arg0: i32, %arg1: memref<1x16x16x4xbf16, #tpu.memory_space<vmem>>, %arg2: memref<3x12x8xbf16, #tpu.memory_space<vmem>>, %arg3: memref<1x8xf32, #tpu.memory_space<vmem>>, %arg4: memref<1x8xf32, #tpu.memory_space<vmem>>, %arg5: memref<3x24x8xbf16, #tpu.memory_space<vmem>>, %arg6: memref<1x8xf32, #tpu.memory_space<vmem>>, %arg7: memref<1x8xf32, #tpu.memory_space<vmem>>, %arg8: memref<1x8x8x8xf32, #tpu.memory_space<vmem>>) attributes {dimension_semantics = [#tpu.dimension_semantics<parallel>], iteration_bounds = array<i64: 2>, scalar_prefetch = 0 : i64, scratch_operands = 0 : i64, tpu.core_type = #tpu.core_type<tc>, window_params = [{transform_indices = @transform_0, window_bounds = array<i64: 1, 16, 16, 4>}, {pipeline_mode = #tpu.pipeline_mode<synchronous>, transform_indices = @transform_1, window_bounds = array<i64: 3, 12, 8>}, {pipeline_mode = #tpu.pipeline_mode<synchronous>, transform_indices = @transform_2, window_bounds = array<i64: 1, 8>}, {pipeline_mode = #tpu.pipeline_mode<synchronous>, transform_indices = @transform_3, window_bounds = array<i64: 1, 8>}, {pipeline_mode = #tpu.pipeline_mode<synchronous>, transform_indices = @transform_4, window_bounds = array<i64: 3, 24, 8>}, {pipeline_mode = #tpu.pipeline_mode<synchronous>, transform_indices = @transform_5, window_bounds = array<i64: 1, 8>}, {pipeline_mode = #tpu.pipeline_mode<synchronous>, transform_indices = @transform_6, window_bounds = array<i64: 1, 8>}, {transform_indices = @transform_7, window_bounds = array<i64: 1, 8, 8, 8>}]} {
    %c0 = arith.constant 0 : index
    %c0_0 = arith.constant 0 : index
    %c0_1 = arith.constant 0 : index
    %c0_2 = arith.constant 0 : index
    %0 = vector.load %arg1[%c0, %c0_0, %c0_1, %c0_2] : memref<1x16x16x4xbf16, #tpu.memory_space<vmem>>, vector<1x16x16x4xbf16>
    %1 = vector.shape_cast %0 : vector<1x16x16x4xbf16> to vector<16x16x4xbf16>
    %2 = vector.shape_cast %1 : vector<16x16x4xbf16> to vector<8x2x16x4xbf16>
    %3 = vector.extract_strided_slice %2 {offsets = [0, 0, 0, 0], sizes = [8, 1, 16, 4], strides = [1, 1, 1, 1]} : vector<8x2x16x4xbf16> to vector<8x1x16x4xbf16>
    %4 = vector.shape_cast %3 : vector<8x1x16x4xbf16> to vector<8x16x4xbf16>
    %5 = vector.extract_strided_slice %2 {offsets = [0, 1, 0, 0], sizes = [8, 1, 16, 4], strides = [1, 1, 1, 1]} : vector<8x2x16x4xbf16> to vector<8x1x16x4xbf16>
    %6 = vector.shape_cast %5 : vector<8x1x16x4xbf16> to vector<8x16x4xbf16>
    %7 = arith.maximumf %4, %6 : vector<8x16x4xbf16>
    %8 = vector.shape_cast %7 : vector<8x16x4xbf16> to vector<8x8x2x4xbf16>
    %9 = vector.extract_strided_slice %8 {offsets = [0, 0, 0, 0], sizes = [8, 8, 1, 4], strides = [1, 1, 1, 1]} : vector<8x8x2x4xbf16> to vector<8x8x1x4xbf16>
    %10 = vector.shape_cast %9 : vector<8x8x1x4xbf16> to vector<8x8x4xbf16>
    %11 = vector.extract_strided_slice %8 {offsets = [0, 0, 1, 0], sizes = [8, 8, 1, 4], strides = [1, 1, 1, 1]} : vector<8x8x2x4xbf16> to vector<8x8x1x4xbf16>
    %12 = vector.shape_cast %11 : vector<8x8x1x4xbf16> to vector<8x8x4xbf16>
    %13 = arith.maximumf %10, %12 : vector<8x8x4xbf16>
    %cst = arith.constant 0.000000e+00 : bf16
    %14 = vector.broadcast %cst : bf16 to vector<1x8x4xbf16>
    %15 = tpu.concatenate %14, %13, %14 in 0 : vector<1x8x4xbf16>, vector<8x8x4xbf16>, vector<1x8x4xbf16> -> vector<10x8x4xbf16>
    %cst_3 = arith.constant 0.000000e+00 : bf16
    %16 = vector.broadcast %cst_3 : bf16 to vector<10x1x4xbf16>
    %17 = vector.extract_strided_slice %15 {offsets = [0, 0, 0], sizes = [10, 7, 4], strides = [1, 1, 1]} : vector<10x8x4xbf16> to vector<10x7x4xbf16>
    %18 = tpu.concatenate %16, %17 in 1 : vector<10x1x4xbf16>, vector<10x7x4xbf16> -> vector<10x8x4xbf16>
    %19 = vector.extract_strided_slice %15 {offsets = [0, 1, 0], sizes = [10, 7, 4], strides = [1, 1, 1]} : vector<10x8x4xbf16> to vector<10x7x4xbf16>
    %20 = tpu.concatenate %19, %16 in 1 : vector<10x7x4xbf16>, vector<10x1x4xbf16> -> vector<10x8x4xbf16>
    %21 = tpu.concatenate %18, %15, %20 in 2 : vector<10x8x4xbf16>, vector<10x8x4xbf16>, vector<10x8x4xbf16> -> vector<10x8x12xbf16>
    %22 = vector.shape_cast %21 : vector<10x8x12xbf16> to vector<80x12xbf16>
    %23 = vector.extract_strided_slice %22 {offsets = [0, 0], sizes = [64, 12], strides = [1, 1]} : vector<80x12xbf16> to vector<64x12xbf16>
    %c0_4 = arith.constant 0 : index
    %c0_5 = arith.constant 0 : index
    %c0_6 = arith.constant 0 : index
    %24 = vector.load %arg2[%c0_4, %c0_5, %c0_6] : memref<3x12x8xbf16, #tpu.memory_space<vmem>>, vector<1x12x8xbf16>
    %25 = vector.shape_cast %24 : vector<1x12x8xbf16> to vector<12x8xbf16>
    %cst_7 = arith.constant dense<0.000000e+00> : vector<64x8xf32>
    %26 = tpu.matmul %23, %25, %cst_7 {dimension_numbers = #tpu.dot_dimension_numbers<[1], [0], [0], [1], [0, 0, 1, 1], [], []>} : vector<64x12xbf16>, vector<12x8xbf16>, vector<64x8xf32> -> vector<64x8xf32>
    %27 = vector.extract_strided_slice %22 {offsets = [8, 0], sizes = [64, 12], strides = [1, 1]} : vector<80x12xbf16> to vector<64x12xbf16>
    %c1 = arith.constant 1 : index
    %c0_8 = arith.constant 0 : index
    %c0_9 = arith.constant 0 : index
    %28 = vector.load %arg2[%c1, %c0_8, %c0_9] : memref<3x12x8xbf16, #tpu.memory_space<vmem>>, vector<1x12x8xbf16>
    %29 = vector.shape_cast %28 : vector<1x12x8xbf16> to vector<12x8xbf16>
    %cst_10 = arith.constant dense<0.000000e+00> : vector<64x8xf32>
    %30 = tpu.matmul %27, %29, %cst_10 {dimension_numbers = #tpu.dot_dimension_numbers<[1], [0], [0], [1], [0, 0, 1, 1], [], []>} : vector<64x12xbf16>, vector<12x8xbf16>, vector<64x8xf32> -> vector<64x8xf32>
    %31 = vector.extract_strided_slice %22 {offsets = [16, 0], sizes = [64, 12], strides = [1, 1]} : vector<80x12xbf16> to vector<64x12xbf16>
    %c2 = arith.constant 2 : index
    %c0_11 = arith.constant 0 : index
    %c0_12 = arith.constant 0 : index
    %32 = vector.load %arg2[%c2, %c0_11, %c0_12] : memref<3x12x8xbf16, #tpu.memory_space<vmem>>, vector<1x12x8xbf16>
    %33 = vector.shape_cast %32 : vector<1x12x8xbf16> to vector<12x8xbf16>
    %cst_13 = arith.constant dense<0.000000e+00> : vector<64x8xf32>
    %34 = tpu.matmul %31, %33, %cst_13 {dimension_numbers = #tpu.dot_dimension_numbers<[1], [0], [0], [1], [0, 0, 1, 1], [], []>} : vector<64x12xbf16>, vector<12x8xbf16>, vector<64x8xf32> -> vector<64x8xf32>
    %35 = arith.addf %26, %30 : vector<64x8xf32>
    %36 = arith.addf %35, %34 : vector<64x8xf32>
    %c0_14 = arith.constant 0 : index
    %c0_15 = arith.constant 0 : index
    %37 = vector.load %arg3[%c0_14, %c0_15] : memref<1x8xf32, #tpu.memory_space<vmem>>, vector<1x8xf32>
    %38 = vector.broadcast %37 : vector<1x8xf32> to vector<64x8xf32>
    %39 = arith.mulf %36, %38 : vector<64x8xf32>
    %c0_16 = arith.constant 0 : index
    %c0_17 = arith.constant 0 : index
    %40 = vector.load %arg4[%c0_16, %c0_17] : memref<1x8xf32, #tpu.memory_space<vmem>>, vector<1x8xf32>
    %41 = vector.broadcast %40 : vector<1x8xf32> to vector<64x8xf32>
    %42 = arith.addf %39, %41 : vector<64x8xf32>
    %cst_18 = arith.constant 0.000000e+00 : f32
    %43 = vector.broadcast %cst_18 : f32 to vector<64x8xf32>
    %44 = arith.maximumf %42, %43 : vector<64x8xf32>
    %45 = arith.truncf %44 : vector<64x8xf32> to vector<64x8xbf16>
    %46 = vector.shape_cast %45 : vector<64x8xbf16> to vector<8x8x8xbf16>
    %cst_19 = arith.constant 0.000000e+00 : bf16
    %47 = vector.broadcast %cst_19 : bf16 to vector<1x8x8xbf16>
    %48 = tpu.concatenate %47, %46, %47 in 0 : vector<1x8x8xbf16>, vector<8x8x8xbf16>, vector<1x8x8xbf16> -> vector<10x8x8xbf16>
    %cst_20 = arith.constant 0.000000e+00 : bf16
    %49 = vector.broadcast %cst_20 : bf16 to vector<10x1x8xbf16>
    %50 = vector.extract_strided_slice %48 {offsets = [0, 0, 0], sizes = [10, 7, 8], strides = [1, 1, 1]} : vector<10x8x8xbf16> to vector<10x7x8xbf16>
    %51 = tpu.concatenate %49, %50 in 1 : vector<10x1x8xbf16>, vector<10x7x8xbf16> -> vector<10x8x8xbf16>
    %52 = vector.extract_strided_slice %48 {offsets = [0, 1, 0], sizes = [10, 7, 8], strides = [1, 1, 1]} : vector<10x8x8xbf16> to vector<10x7x8xbf16>
    %53 = tpu.concatenate %52, %49 in 1 : vector<10x7x8xbf16>, vector<10x1x8xbf16> -> vector<10x8x8xbf16>
    %54 = tpu.concatenate %51, %48, %53 in 2 : vector<10x8x8xbf16>, vector<10x8x8xbf16>, vector<10x8x8xbf16> -> vector<10x8x24xbf16>
    %55 = vector.shape_cast %54 : vector<10x8x24xbf16> to vector<80x24xbf16>
    %56 = vector.extract_strided_slice %55 {offsets = [0, 0], sizes = [64, 24], strides = [1, 1]} : vector<80x24xbf16> to vector<64x24xbf16>
    %c0_21 = arith.constant 0 : index
    %c0_22 = arith.constant 0 : index
    %c0_23 = arith.constant 0 : index
    %57 = vector.load %arg5[%c0_21, %c0_22, %c0_23] : memref<3x24x8xbf16, #tpu.memory_space<vmem>>, vector<1x24x8xbf16>
    %58 = vector.shape_cast %57 : vector<1x24x8xbf16> to vector<24x8xbf16>
    %cst_24 = arith.constant dense<0.000000e+00> : vector<64x8xf32>
    %59 = tpu.matmul %56, %58, %cst_24 {dimension_numbers = #tpu.dot_dimension_numbers<[1], [0], [0], [1], [0, 0, 1, 1], [], []>} : vector<64x24xbf16>, vector<24x8xbf16>, vector<64x8xf32> -> vector<64x8xf32>
    %60 = vector.extract_strided_slice %55 {offsets = [8, 0], sizes = [64, 24], strides = [1, 1]} : vector<80x24xbf16> to vector<64x24xbf16>
    %c1_25 = arith.constant 1 : index
    %c0_26 = arith.constant 0 : index
    %c0_27 = arith.constant 0 : index
    %61 = vector.load %arg5[%c1_25, %c0_26, %c0_27] : memref<3x24x8xbf16, #tpu.memory_space<vmem>>, vector<1x24x8xbf16>
    %62 = vector.shape_cast %61 : vector<1x24x8xbf16> to vector<24x8xbf16>
    %cst_28 = arith.constant dense<0.000000e+00> : vector<64x8xf32>
    %63 = tpu.matmul %60, %62, %cst_28 {dimension_numbers = #tpu.dot_dimension_numbers<[1], [0], [0], [1], [0, 0, 1, 1], [], []>} : vector<64x24xbf16>, vector<24x8xbf16>, vector<64x8xf32> -> vector<64x8xf32>
    %64 = vector.extract_strided_slice %55 {offsets = [16, 0], sizes = [64, 24], strides = [1, 1]} : vector<80x24xbf16> to vector<64x24xbf16>
    %c2_29 = arith.constant 2 : index
    %c0_30 = arith.constant 0 : index
    %c0_31 = arith.constant 0 : index
    %65 = vector.load %arg5[%c2_29, %c0_30, %c0_31] : memref<3x24x8xbf16, #tpu.memory_space<vmem>>, vector<1x24x8xbf16>
    %66 = vector.shape_cast %65 : vector<1x24x8xbf16> to vector<24x8xbf16>
    %cst_32 = arith.constant dense<0.000000e+00> : vector<64x8xf32>
    %67 = tpu.matmul %64, %66, %cst_32 {dimension_numbers = #tpu.dot_dimension_numbers<[1], [0], [0], [1], [0, 0, 1, 1], [], []>} : vector<64x24xbf16>, vector<24x8xbf16>, vector<64x8xf32> -> vector<64x8xf32>
    %68 = arith.addf %59, %63 : vector<64x8xf32>
    %69 = arith.addf %68, %67 : vector<64x8xf32>
    %c0_33 = arith.constant 0 : index
    %c0_34 = arith.constant 0 : index
    %70 = vector.load %arg6[%c0_33, %c0_34] : memref<1x8xf32, #tpu.memory_space<vmem>>, vector<1x8xf32>
    %71 = vector.broadcast %70 : vector<1x8xf32> to vector<64x8xf32>
    %72 = arith.mulf %69, %71 : vector<64x8xf32>
    %c0_35 = arith.constant 0 : index
    %c0_36 = arith.constant 0 : index
    %73 = vector.load %arg7[%c0_35, %c0_36] : memref<1x8xf32, #tpu.memory_space<vmem>>, vector<1x8xf32>
    %74 = vector.broadcast %73 : vector<1x8xf32> to vector<64x8xf32>
    %75 = arith.addf %72, %74 : vector<64x8xf32>
    %cst_37 = arith.constant 0.000000e+00 : f32
    %76 = vector.broadcast %cst_37 : f32 to vector<64x8xf32>
    %77 = arith.maximumf %75, %76 : vector<64x8xf32>
    %78 = vector.shape_cast %77 : vector<64x8xf32> to vector<8x8x8xf32>
    %c0_38 = arith.constant 0 : index
    %c0_39 = arith.constant 0 : index
    %c0_40 = arith.constant 0 : index
    %c0_41 = arith.constant 0 : index
    %79 = vector.load %arg8[%c0_38, %c0_39, %c0_40, %c0_41] : memref<1x8x8x8xf32, #tpu.memory_space<vmem>>, vector<1x8x8x8xf32>
    %80 = vector.shape_cast %79 : vector<1x8x8x8xf32> to vector<8x8x8xf32>
    %81 = vector.shape_cast %78 : vector<8x8x8xf32> to vector<1x8x8x8xf32>
    tpu.vector_store %arg8[%c0_38, %c0_39, %c0_40, %c0_41], %81 {strides = array<i32>} : memref<1x8x8x8xf32, #tpu.memory_space<vmem>>, vector<1x8x8x8xf32>,
    return
  }
  func.func @transform_0(%arg0: i32) -> (i32, i32, i32, i32) {
    %c0_i32 = arith.constant 0 : i32
    %c0_i32_0 = arith.constant 0 : i32
    %c0_i32_1 = arith.constant 0 : i32
    %c0_i32_2 = arith.constant 0 : i32
    return %arg0, %c0_i32, %c0_i32_0, %c0_i32_1 : i32, i32, i32, i32
  }
  func.func @transform_1(%arg0: i32) -> (i32, i32, i32) {
    %c0_i32 = arith.constant 0 : i32
    %c0_i32_0 = arith.constant 0 : i32
    %c0_i32_1 = arith.constant 0 : i32
    %c0_i32_2 = arith.constant 0 : i32
    return %c0_i32, %c0_i32_0, %c0_i32_1 : i32, i32, i32
  }
  func.func @transform_2(%arg0: i32) -> (i32, i32) {
    %c0_i32 = arith.constant 0 : i32
    %c0_i32_0 = arith.constant 0 : i32
    %c0_i32_1 = arith.constant 0 : i32
    return %c0_i32, %c0_i32_0 : i32, i32
  }
  func.func @transform_3(%arg0: i32) -> (i32, i32) {
    %c0_i32 = arith.constant 0 : i32
    %c0_i32_0 = arith.constant 0 : i32
    %c0_i32_1 = arith.constant 0 : i32
    return %c0_i32, %c0_i32_0 : i32, i32
  }
  func.func @transform_4(%arg0: i32) -> (i32, i32, i32) {
    %c0_i32 = arith.constant 0 : i32
    %c0_i32_0 = arith.constant 0 : i32
    %c0_i32_1 = arith.constant 0 : i32
    %c0_i32_2 = arith.constant 0 : i32
    return %c0_i32, %c0_i32_0, %c0_i32_1 : i32, i32, i32
  }
  func.func @transform_5(%arg0: i32) -> (i32, i32) {
    %c0_i32 = arith.constant 0 : i32
    %c0_i32_0 = arith.constant 0 : i32
    %c0_i32_1 = arith.constant 0 : i32
    return %c0_i32, %c0_i32_0 : i32, i32
  }
  func.func @transform_6(%arg0: i32) -> (i32, i32) {
    %c0_i32 = arith.constant 0 : i32
    %c0_i32_0 = arith.constant 0 : i32
    %c0_i32_1 = arith.constant 0 : i32
    return %c0_i32, %c0_i32_0 : i32, i32
  }
  func.func @transform_7(%arg0: i32) -> (i32, i32, i32, i32) {
    %c0_i32 = arith.constant 0 : i32
    %c0_i32_0 = arith.constant 0 : i32
    %c0_i32_1 = arith.constant 0 : i32
    %c0_i32_2 = arith.constant 0 : i32
    return %arg0, %c0_i32, %c0_i32_0, %c0_i32_1 : i32, i32, i32, i32
  }
}

</mosaic_0001>

<llo_original>
// kernel: tpu_custom_call.1
$region0: #{tpu_custom_call.1}
  #allocation0 [shape = 'u32[]', space=smem, size = 0x4, offset = 0x4, fixed_abs, tag = 'smem constant byte address 0x4 - core index']
  #allocation1 [shape = 'u32[72,128]{1,0:T(1,128)}', space=vmem, size = 0x9000, scoped, tag = 'internal scratch']
  %s0 = inlined_call_operand.vmem [shape: bf16[2,16,16,4], index: 0, kind: input, shape index: {}]
  %s1 = inlined_call_operand.vmem [shape: bf16[3,12,8], index: 1, kind: input, shape index: {}]
  %s2 = inlined_call_operand.vmem [shape: f32[1,8], index: 2, kind: input, shape index: {}]
  %s3 = inlined_call_operand.vmem [shape: f32[1,8], index: 3, kind: input, shape index: {}]
  %s4 = inlined_call_operand.vmem [shape: bf16[3,24,8], index: 4, kind: input, shape index: {}]
  %s5 = inlined_call_operand.vmem [shape: f32[1,8], index: 5, kind: input, shape index: {}]
  %s6 = inlined_call_operand.vmem [shape: f32[1,8], index: 6, kind: input, shape index: {}]
  %s7 = inlined_call_operand.hbm [shape: f32[2,8,8,8], index: 7, kind: output, shape index: {}]
  %s8 = sld [smem:[#allocation0]]
  $region61: #{tpu_custom_call.1} parent=0
    _
  %s10 = ssub.s32 1, %s8
  %s11 = scalar_select 0, %s10, %s8
  $region1: #{tpu_custom_call.1} parent=0
    #allocation2 [shape = 'u8[65536]{0}', space=vmem, size = 0x10000, scoped, tag = 'output window, operand 0']
    #allocation3 [shape = 's32[2]{0}', space=sflag, size = 0x8, scoped, tag = 'scoped memory for tpu_custom_call.1']
    %12 = vsyncpa [#allocation3], 0
    %s13 = scalar_lea.sflag [#allocation3], 1
    %14 = vsyncpa %s13, 0
    loop: start=0, step=1, limit=4
    $region2: #{tpu_custom_call.1} parent=1 // loop_pre_header
      _
    $region3: #{tpu_custom_call.1} parent=1 // loop_header
      %s16 = sphi 0, %s20
      %p17 = scmp.ge.s32.totalorder %s16, 4
      %s26 = sphi 0, %s28
      %s29 = sphi 0, %s26
      %s30 = sphi 0, %s29
      %s46 = sphi 0, %s30
      %s50 = sphi 0, %s50
      %s52 = sphi 0, %s50
      %s53 = sphi 0, %s52
      %s67 = sphi 0, %s53
      %s71 = sphi 0, %s71
      %s73 = sphi 0, %s71
      %s74 = sphi 0, %s73
      %s88 = sphi 0, %s74
      %s92 = sphi 0, %s92
      %s94 = sphi 0, %s92
      %s95 = sphi 0, %s94
      %s109 = sphi 0, %s95
      %s113 = sphi 0, %s113
      %s115 = sphi 0, %s113
      %s116 = sphi 0, %s115
      %s130 = sphi 0, %s116
      %s134 = sphi 0, %s134
      %s136 = sphi 0, %s134
      %s137 = sphi 0, %s136
      %s151 = sphi 0, %s137
      %s155 = sphi 0, %s155
      %s157 = sphi 0, %s155
      %s158 = sphi 0, %s157
      %s172 = sphi 0, %s158
      %s178 = sphi 0, %s180
      %s181 = sphi 0, %s178
      %s182 = sphi 0, %s181
      %s198 = sphi 0, %s182
    $region4: #{tpu_custom_call.1} parent=1 // loop_header_branch
      %19 = sbr.rel (%p17) target = $region8
    $region5: #{tpu_custom_call.1} parent=1 // loop_body
      %s21 = ssub.s32 %s16, 1
      %s22 = ssub.s32 %s16, 2
      %s23 = sadd.s32 %s16, 1
      %s24 = ssub.s32 %s16, %s23
      %p25 = scmp.eq.s32.totalorder %s24, 0
      %s27 = sadd.s32 %s26, 1
      %s28 = scalar_select %p25, %s26, %s27
      %p31 = pneg %p25
      %p32 = scmp.eq.s32.totalorder %s16, 1
      %p33 = por %p31, %p32
      %p34 = scmp.ne.s32.totalorder %s26, %s29
      %p35 = scmp.eq.s32.totalorder %s16, 0
      %p36 = por %p34, %p35
      %p37 = scmp.ne.s32.totalorder %s26, %s29
      %p38 = scmp.eq.s32.totalorder %s21, 1
      %p39 = por %p37, %p38
      %p40 = scmp.ne.s32.totalorder %s29, %s30
      %p41 = scmp.eq.s32.totalorder %s21, 0
      %p42 = por %p40, %p41
      %p43 = scmp.ne.s32.totalorder %s29, %s30
      %p44 = scmp.eq.s32.totalorder %s22, 1
      %p45 = por %p43, %p44
      %p47 = scmp.ne.s32.totalorder %s30, %s46
      %p48 = scmp.eq.s32.totalorder %s22, 0
      %p49 = por %p47, %p48
      %s51 = sadd.s32 %s50, 1
      %p54 = scmp.eq.s32.totalorder %s16, 1
      %p55 = scmp.ne.s32.totalorder %s50, %s52
      %p56 = scmp.eq.s32.totalorder %s16, 0
      %p57 = por %p55, %p56
      %p58 = scmp.ne.s32.totalorder %s50, %s52
      %p59 = scmp.eq.s32.totalorder %s21, 1
      %p60 = por %p58, %p59
      %p61 = scmp.ne.s32.totalorder %s52, %s53
      %p62 = scmp.eq.s32.totalorder %s21, 0
      %p63 = por %p61, %p62
      %p64 = scmp.ne.s32.totalorder %s52, %s53
      %p65 = scmp.eq.s32.totalorder %s22, 1
      %p66 = por %p64, %p65
      %p68 = scmp.ne.s32.totalorder %s53, %s67
      %p69 = scmp.eq.s32.totalorder %s22, 0
      %p70 = por %p68, %p69
      %s72 = sadd.s32 %s71, 1
      %p75 = scmp.eq.s32.totalorder %s16, 1
      %p76 = scmp.ne.s32.totalorder %s71, %s73
      %p77 = scmp.eq.s32.totalorder %s16, 0
      %p78 = por %p76, %p77
      %p79 = scmp.ne.s32.totalorder %s71, %s73
      %p80 = scmp.eq.s32.totalorder %s21, 1
      %p81 = por %p79, %p80
      %p82 = scmp.ne.s32.totalorder %s73, %s74
      %p83 = scmp.eq.s32.totalorder %s21, 0
      %p84 = por %p82, %p83
      %p85 = scmp.ne.s32.totalorder %s73, %s74
      %p86 = scmp.eq.s32.totalorder %s22, 1
      %p87 = por %p85, %p86
      %p89 = scmp.ne.s32.totalorder %s74, %s88
      %p90 = scmp.eq.s32.totalorder %s22, 0
      %p91 = por %p89, %p90
      %s93 = sadd.s32 %s92, 1
      %p96 = scmp.eq.s32.totalorder %s16, 1
      %p97 = scmp.ne.s32.totalorder %s92, %s94
      %p98 = scmp.eq.s32.totalorder %s16, 0
      %p99 = por %p97, %p98
      %p100 = scmp.ne.s32.totalorder %s92, %s94
      %p101 = scmp.eq.s32.totalorder %s21, 1
      %p102 = por %p100, %p101
      %p103 = scmp.ne.s32.totalorder %s94, %s95
      %p104 = scmp.eq.s32.totalorder %s21, 0
      %p105 = por %p103, %p104
      %p106 = scmp.ne.s32.totalorder %s94, %s95
      %p107 = scmp.eq.s32.totalorder %s22, 1
      %p108 = por %p106, %p107
      %p110 = scmp.ne.s32.totalorder %s95, %s109
      %p111 = scmp.eq.s32.totalorder %s22, 0
      %p112 = por %p110, %p111
      %s114 = sadd.s32 %s113, 1
      %p117 = scmp.eq.s32.totalorder %s16, 1
      %p118 = scmp.ne.s32.totalorder %s113, %s115
      %p119 = scmp.eq.s32.totalorder %s16, 0
      %p120 = por %p118, %p119
      %p121 = scmp.ne.s32.totalorder %s113, %s115
      %p122 = scmp.eq.s32.totalorder %s21, 1
      %p123 = por %p121, %p122
      %p124 = scmp.ne.s32.totalorder %s115, %s116
      %p125 = scmp.eq.s32.totalorder %s21, 0
      %p126 = por %p124, %p125
      %p127 = scmp.ne.s32.totalorder %s115, %s116
      %p128 = scmp.eq.s32.totalorder %s22, 1
      %p129 = por %p127, %p128
      %p131 = scmp.ne.s32.totalorder %s116, %s130
      %p132 = scmp.eq.s32.totalorder %s22, 0
      %p133 = por %p131, %p132
      %s135 = sadd.s32 %s134, 1
      %p138 = scmp.eq.s32.totalorder %s16, 1
      %p139 = scmp.ne.s32.totalorder %s134, %s136
      %p140 = scmp.eq.s32.totalorder %s16, 0
      %p141 = por %p139, %p140
      %p142 = scmp.ne.s32.totalorder %s134, %s136
      %p143 = scmp.eq.s32.totalorder %s21, 1
      %p144 = por %p142, %p143
      %p145 = scmp.ne.s32.totalorder %s136, %s137
      %p146 = scmp.eq.s32.totalorder %s21, 0
      %p147 = por %p145, %p146
      %p148 = scmp.ne.s32.totalorder %s136, %s137
      %p149 = scmp.eq.s32.totalorder %s22, 1
      %p150 = por %p148, %p149
      %p152 = scmp.ne.s32.totalorder %s137, %s151
      %p153 = scmp.eq.s32.totalorder %s22, 0
      %p154 = por %p152, %p153
      %s156 = sadd.s32 %s155, 1
      %p159 = scmp.eq.s32.totalorder %s16, 1
      %p160 = scmp.ne.s32.totalorder %s155, %s157
      %p161 = scmp.eq.s32.totalorder %s16, 0
      %p162 = por %p160, %p161
      %p163 = scmp.ne.s32.totalorder %s155, %s157
      %p164 = scmp.eq.s32.totalorder %s21, 1
      %p165 = por %p163, %p164
      %p166 = scmp.ne.s32.totalorder %s157, %s158
      %p167 = scmp.eq.s32.totalorder %s21, 0
      %p168 = por %p166, %p167
      %p169 = scmp.ne.s32.totalorder %s157, %s158
      %p170 = scmp.eq.s32.totalorder %s22, 1
      %p171 = por %p169, %p170
      %p173 = scmp.ne.s32.totalorder %s158, %s172
      %p174 = scmp.eq.s32.totalorder %s22, 0
      %p175 = por %p173, %p174
      %s176 = ssub.s32 %s16, %s23
      %p177 = scmp.eq.s32.totalorder %s176, 0
      %s179 = sadd.s32 %s178, 1
      %s180 = scalar_select %p177, %s178, %s179
      %p183 = pneg %p177
      %p184 = scmp.eq.s32.totalorder %s16, 1
      %p185 = por %p183, %p184
      %p186 = scmp.ne.s32.totalorder %s178, %s181
      %p187 = scmp.eq.s32.totalorder %s16, 0
      %p188 = por %p186, %p187
      %p189 = scmp.ne.s32.totalorder %s178, %s181
      %p190 = scmp.eq.s32.totalorder %s21, 1
      %p191 = por %p189, %p190
      %p192 = scmp.ne.s32.totalorder %s181, %s182
      %p193 = scmp.eq.s32.totalorder %s21, 0
      %p194 = por %p192, %p193
      %p195 = scmp.ne.s32.totalorder %s181, %s182
      %p196 = scmp.eq.s32.totalorder %s22, 1
      %p197 = por %p195, %p196
      %p199 = scmp.ne.s32.totalorder %s182, %s198
      %p200 = scmp.eq.s32.totalorder %s22, 0
      %p201 = por %p199, %p200
      %p202 = scmp.le.s32.totalorder 1, %s16
      %p203 = scmp.lt.s32.totalorder %s16, 3
      %p204 = pnand %p202, %p203
      %p205 = pneg %p204
      // Predicated region
      $region9: #{tpu_custom_call.1} parent=5 // pred_check
        _
      $region10: #{tpu_custom_call.1} parent=5 // pred_check_branch
        %207 = sbr.rel (%p204) target = $region12
      $region11: #{tpu_custom_call.1} parent=5 // pred_region
        %s208 = ssub.s32 %s16, 1
        // Predicated region
        $region13: #{tpu_custom_call.1} parent=11 // pred_check
          %p209 = pneg %p63
        $region14: #{tpu_custom_call.1} parent=11 // pred_check_branch
          %211 = sbr.rel (%p209) target = $region16
        $region15: #{tpu_custom_call.1} parent=11 // pred_region
          _
        $region16: #{tpu_custom_call.1} parent=11 // pred_fallthru
          _
        // Predicated region
        $region17: #{tpu_custom_call.1} parent=11 // pred_check
          %p212 = pneg %p84
        $region18: #{tpu_custom_call.1} parent=11 // pred_check_branch
          %214 = sbr.rel (%p212) target = $region20
        $region19: #{tpu_custom_call.1} parent=11 // pred_region
          _
        $region20: #{tpu_custom_call.1} parent=11 // pred_fallthru
          _
        // Predicated region
        $region21: #{tpu_custom_call.1} parent=11 // pred_check
          %p215 = pneg %p105
        $region22: #{tpu_custom_call.1} parent=11 // pred_check_branch
          %217 = sbr.rel (%p215) target = $region24
        $region23: #{tpu_custom_call.1} parent=11 // pred_region
          _
        $region24: #{tpu_custom_call.1} parent=11 // pred_fallthru
          _
        // Predicated region
        $region25: #{tpu_custom_call.1} parent=11 // pred_check
          %p218 = pneg %p126
        $region26: #{tpu_custom_call.1} parent=11 // pred_check_branch
          %220 = sbr.rel (%p218) target = $region28
        $region27: #{tpu_custom_call.1} parent=11 // pred_region
          _
        $region28: #{tpu_custom_call.1} parent=11 // pred_fallthru
          _
        // Predicated region
        $region29: #{tpu_custom_call.1} parent=11 // pred_check
          %p221 = pneg %p147
        $region30: #{tpu_custom_call.1} parent=11 // pred_check_branch
          %223 = sbr.rel (%p221) target = $region32
        $region31: #{tpu_custom_call.1} parent=11 // pred_region
          _
        $region32: #{tpu_custom_call.1} parent=11 // pred_fallthru
          _
        // Predicated region
        $region33: #{tpu_custom_call.1} parent=11 // pred_check
          %p224 = pneg %p168
        $region34: #{tpu_custom_call.1} parent=11 // pred_check_branch
          %226 = sbr.rel (%p224) target = $region36
        $region35: #{tpu_custom_call.1} parent=11 // pred_region
          _
        $region36: #{tpu_custom_call.1} parent=11 // pred_fallthru
          _
      $region12: #{tpu_custom_call.1} parent=5 // pred_fallthru
        _
      %p227 = scmp.lt.s32.totalorder %s16, 2
      // Predicated region
      $region37: #{tpu_custom_call.1} parent=5 // pred_check
        %p228 = pneg %p227
      $region38: #{tpu_custom_call.1} parent=5 // pred_check_branch
        %230 = sbr.rel (%p228) target = $region40
      $region39: #{tpu_custom_call.1} parent=5 // pred_region
        // Predicated region
        $region41: #{tpu_custom_call.1} parent=39 // pred_check
          %p231 = pneg %p36
        $region42: #{tpu_custom_call.1} parent=39 // pred_check_branch
          %233 = sbr.rel (%p231) target = $region44
        $region43: #{tpu_custom_call.1} parent=39 // pred_region
          %p234 = scmp.lt.s32.totalorder %s16, 1
          %s235 = scalar_select %p234, %s16, 1
          %s236 = smul.addr %s235, 32
          %s237 = smul.addr %s236, 4
          %s238 = scalar_lea.vmem %s0, %s237
        $region44: #{tpu_custom_call.1} parent=39 // pred_fallthru
          _
      $region40: #{tpu_custom_call.1} parent=5 // pred_fallthru
        _
      %p239 = scmp.le.s32.totalorder 1, %s16
      %p240 = scmp.lt.s32.totalorder %s16, 3
      %p241 = pnand %p239, %p240
      %p242 = pneg %p241
      // Predicated region
      $region45: #{tpu_custom_call.1} parent=5 // pred_check
        _
      $region46: #{tpu_custom_call.1} parent=5 // pred_check_branch
        %244 = sbr.rel (%p241) target = $region48
      $region47: #{tpu_custom_call.1} parent=5 // pred_region
        %s245 = ssub.s32 %s16, 1
        %p246 = scmp.lt.s32.totalorder %s21, 1
        %s247 = scalar_select %p246, %s21, 1
        %s248 = smul.addr %s247, 32
        %s249 = smul.addr %s248, 4
        %s250 = scalar_lea.vmem %s0, %s249
        %p251 = pneg %p42
        %p252 = pneg %p39
        %p253 = pneg %p63
        %p254 = pneg %p60
        %p255 = pneg %p84
        %p256 = pneg %p81
        %p257 = pneg %p105
        %p258 = pneg %p102
        %p259 = pneg %p126
        %p260 = pneg %p123
        %p261 = pneg %p147
        %p262 = pneg %p144
        %p263 = pneg %p168
        %p264 = pneg %p165
        %p265 = pneg %p194
        %p266 = pneg %p191
        %s267 = sand.u32 %s181, 1
        %s268 = scalar_lea.sflag [#allocation3], %s267
        %s269 = sand.u32 %s181, 1
        %s270 = smul.addr %s269, 64
        %s271 = scalar_lea.vmem [#allocation2], %s270
        %p272 = scmp.lt.s32.totalorder %s21, 1
        %s273 = scalar_select %p272, %s21, 1
        %s274 = smul.addr %s273, 32
        %s275 = smul.addr %s274, 4
        %s276 = scalar_lea.vmem %s0, %s275
        %v278 = vld [vmem:[%s276] sm:$0xf]
        %v279 = vld [vmem:[%s276 + $0x4] sm:$0xf]
        %v280 = vld [vmem:[%s276 + $0x8] sm:$0xf]
        %v281 = vld [vmem:[%s276 + $0xc] sm:$0xf]
        %v282 = vld [vmem:[%s276 + $0x10] sm:$0xf]
        %v283 = vld [vmem:[%s276 + $0x14] sm:$0xf]
        %v284 = vld [vmem:[%s276 + $0x18] sm:$0xf]
        %v285 = vld [vmem:[%s276 + $0x1c] sm:$0xf]
        %v286 = vld [vmem:[%s276 + $0x20] sm:$0xf]
        %v287 = vld [vmem:[%s276 + $0x24] sm:$0xf]
        %v288 = vld [vmem:[%s276 + $0x28] sm:$0xf]
        %v289 = vld [vmem:[%s276 + $0x2c] sm:$0xf]
        %v290 = vld [vmem:[%s276 + $0x30] sm:$0xf]
        %v291 = vld [vmem:[%s276 + $0x34] sm:$0xf]
        %v292 = vld [vmem:[%s276 + $0x38] sm:$0xf]
        %v293 = vld [vmem:[%s276 + $0x3c] sm:$0xf]
        %v294 = vld [vmem:[%s276 + $0x40] sm:$0xf]
        %v295 = vld [vmem:[%s276 + $0x44] sm:$0xf]
        %v296 = vld [vmem:[%s276 + $0x48] sm:$0xf]
        %v297 = vld [vmem:[%s276 + $0x4c] sm:$0xf]
        %v298 = vld [vmem:[%s276 + $0x50] sm:$0xf]
        %v299 = vld [vmem:[%s276 + $0x54] sm:$0xf]
        %v300 = vld [vmem:[%s276 + $0x58] sm:$0xf]
        %v301 = vld [vmem:[%s276 + $0x5c] sm:$0xf]
        %v302 = vld [vmem:[%s276 + $0x60] sm:$0xf]
        %v303 = vld [vmem:[%s276 + $0x64] sm:$0xf]
        %v304 = vld [vmem:[%s276 + $0x68] sm:$0xf]
        %v305 = vld [vmem:[%s276 + $0x6c] sm:$0xf]
        %v306 = vld [vmem:[%s276 + $0x70] sm:$0xf]
        %v307 = vld [vmem:[%s276 + $0x74] sm:$0xf]
        %v308 = vld [vmem:[%s276 + $0x78] sm:$0xf]
        %v309 = vld [vmem:[%s276 + $0x7c] sm:$0xf]
        %v310 = vunpack.c.l.bf16 %v278
        %v311 = vunpack.c.l.bf16 %v279
        %v312 = vunpack.c.l.bf16 %v282
        %v313 = vunpack.c.l.bf16 %v283
        %v314 = vunpack.c.l.bf16 %v286
        %v315 = vunpack.c.l.bf16 %v287
        %v316 = vunpack.c.l.bf16 %v290
        %v317 = vunpack.c.l.bf16 %v291
        %v318 = vunpack.c.l.bf16 %v294
        %v319 = vunpack.c.l.bf16 %v295
        %v320 = vunpack.c.l.bf16 %v298
        %v321 = vunpack.c.l.bf16 %v299
        %v322 = vunpack.c.l.bf16 %v302
        %v323 = vunpack.c.l.bf16 %v303
        %v324 = vunpack.c.l.bf16 %v306
        %v325 = vunpack.c.l.bf16 %v307
        %v326 = vunpack.c.l.bf16 %v280
        %v327 = vunpack.c.l.bf16 %v281
        %v328 = vunpack.c.l.bf16 %v284
        %v329 = vunpack.c.l.bf16 %v285
        %v330 = vunpack.c.l.bf16 %v288
        %v331 = vunpack.c.l.bf16 %v289
        %v332 = vunpack.c.l.bf16 %v292
        %v333 = vunpack.c.l.bf16 %v293
        %v334 = vunpack.c.l.bf16 %v296
        %v335 = vunpack.c.l.bf16 %v297
        %v336 = vunpack.c.l.bf16 %v300
        %v337 = vunpack.c.l.bf16 %v301
        %v338 = vunpack.c.l.bf16 %v304
        %v339 = vunpack.c.l.bf16 %v305
        %v340 = vunpack.c.l.bf16 %v308
        %v341 = vunpack.c.l.bf16 %v309
        %v342 = vmax.f32 %v310, %v326
        %v343 = vmax.f32 %v311, %v327
        %v344 = vmax.f32 %v312, %v328
        %v345 = vmax.f32 %v313, %v329
        %v346 = vmax.f32 %v314, %v330
        %v347 = vmax.f32 %v315, %v331
        %v348 = vmax.f32 %v316, %v332
        %v349 = vmax.f32 %v317, %v333
        %v350 = vmax.f32 %v318, %v334
        %v351 = vmax.f32 %v319, %v335
        %v352 = vmax.f32 %v320, %v336
        %v353 = vmax.f32 %v321, %v337
        %v354 = vmax.f32 %v322, %v338
        %v355 = vmax.f32 %v323, %v339
        %v356 = vmax.f32 %v324, %v340
        %v357 = vmax.f32 %v325, %v341
        %v358 = vpack.c.bf16 %v342, %v342
        %v359 = vpack.c.bf16 %v343, %v343
        %v360 = vpack.c.bf16 %v344, %v344
        %v361 = vpack.c.bf16 %v345, %v345
        %v362 = vpack.c.bf16 %v346, %v346
        %v363 = vpack.c.bf16 %v347, %v347
        %v364 = vpack.c.bf16 %v348, %v348
        %v365 = vpack.c.bf16 %v349, %v349
        %v366 = vpack.c.bf16 %v350, %v350
        %v367 = vpack.c.bf16 %v351, %v351
        %v368 = vpack.c.bf16 %v352, %v352
        %v369 = vpack.c.bf16 %v353, %v353
        %v370 = vpack.c.bf16 %v354, %v354
        %v371 = vpack.c.bf16 %v355, %v355
        %v372 = vpack.c.bf16 %v356, %v356
        %v373 = vpack.c.bf16 %v357, %v357
        %v390 = vrot.slane %v358, 3
        %v391 = vrot.slane %v359, 3
        %v392 = vrot.slane %v360, 3
        %v393 = vrot.slane %v361, 3
        %v394 = vrot.slane %v362, 3
        %v395 = vrot.slane %v363, 3
        %v396 = vrot.slane %v364, 3
        %v397 = vrot.slane %v365, 3
        %v398 = vrot.slane %v366, 3
        %v399 = vrot.slane %v367, 3
        %v400 = vrot.slane %v368, 3
        %v401 = vrot.slane %v369, 3
        %v402 = vrot.slane %v370, 3
        %v403 = vrot.slane %v371, 3
        %v404 = vrot.slane %v372, 3
        %v405 = vrot.slane %v373, 3
        %vm406 = vcmask 1040384
        %v409 = vsel %vm406, %v358, %v390
        %vm410 = vcmask 1041409
        %v411 = vsel %vm410, %v358, %v390
        %v413 = vrot.slane %v411, 1
        %vm414 = vcmask 1042434
        %v415 = vsel %vm414, %v358, %v390
        %v417 = vrot.slane %v415, 2
        %vm418 = vcmask 1043459
        %v419 = vsel %vm418, %v358, %v390
        %v421 = vrot.slane %v419, 3
        %v424 = vsel %vm406, %v359, %v391
        %v425 = vsel %vm410, %v359, %v391
        %v427 = vrot.slane %v425, 1
        %v428 = vsel %vm414, %v359, %v391
        %v430 = vrot.slane %v428, 2
        %v431 = vsel %vm418, %v359, %v391
        %v433 = vrot.slane %v431, 3
        %v436 = vsel %vm406, %v360, %v392
        %v437 = vsel %vm410, %v360, %v392
        %v439 = vrot.slane %v437, 1
        %v440 = vsel %vm414, %v360, %v392
        %v442 = vrot.slane %v440, 2
        %v443 = vsel %vm418, %v360, %v392
        %v445 = vrot.slane %v443, 3
        %v448 = vsel %vm406, %v361, %v393
        %v449 = vsel %vm410, %v361, %v393
        %v451 = vrot.slane %v449, 1
        %v452 = vsel %vm414, %v361, %v393
        %v454 = vrot.slane %v452, 2
        %v455 = vsel %vm418, %v361, %v393
        %v457 = vrot.slane %v455, 3
        %v460 = vsel %vm406, %v362, %v394
        %v461 = vsel %vm410, %v362, %v394
        %v463 = vrot.slane %v461, 1
        %v464 = vsel %vm414, %v362, %v394
        %v466 = vrot.slane %v464, 2
        %v467 = vsel %vm418, %v362, %v394
        %v469 = vrot.slane %v467, 3
        %v472 = vsel %vm406, %v363, %v395
        %v473 = vsel %vm410, %v363, %v395
        %v475 = vrot.slane %v473, 1
        %v476 = vsel %vm414, %v363, %v395
        %v478 = vrot.slane %v476, 2
        %v479 = vsel %vm418, %v363, %v395
        %v481 = vrot.slane %v479, 3
        %v484 = vsel %vm406, %v364, %v396
        %v485 = vsel %vm410, %v364, %v396
        %v487 = vrot.slane %v485, 1
        %v488 = vsel %vm414, %v364, %v396
        %v490 = vrot.slane %v488, 2
        %v491 = vsel %vm418, %v364, %v396
        %v493 = vrot.slane %v491, 3
        %v496 = vsel %vm406, %v365, %v397
        %v497 = vsel %vm410, %v365, %v397
        %v499 = vrot.slane %v497, 1
        %v500 = vsel %vm414, %v365, %v397
        %v502 = vrot.slane %v500, 2
        %v503 = vsel %vm418, %v365, %v397
        %v505 = vrot.slane %v503, 3
        %v508 = vsel %vm406, %v366, %v398
        %v509 = vsel %vm410, %v366, %v398
        %v511 = vrot.slane %v509, 1
        %v512 = vsel %vm414, %v366, %v398
        %v514 = vrot.slane %v512, 2
        %v515 = vsel %vm418, %v366, %v398
        %v517 = vrot.slane %v515, 3
        %v520 = vsel %vm406, %v367, %v399
        %v521 = vsel %vm410, %v367, %v399
        %v523 = vrot.slane %v521, 1
        %v524 = vsel %vm414, %v367, %v399
        %v526 = vrot.slane %v524, 2
        %v527 = vsel %vm418, %v367, %v399
        %v529 = vrot.slane %v527, 3
        %v532 = vsel %vm406, %v368, %v400
        %v533 = vsel %vm410, %v368, %v400
        %v535 = vrot.slane %v533, 1
        %v536 = vsel %vm414, %v368, %v400
        %v538 = vrot.slane %v536, 2
        %v539 = vsel %vm418, %v368, %v400
        %v541 = vrot.slane %v539, 3
        %v544 = vsel %vm406, %v369, %v401
        %v545 = vsel %vm410, %v369, %v401
        %v547 = vrot.slane %v545, 1
        %v548 = vsel %vm414, %v369, %v401
        %v550 = vrot.slane %v548, 2
        %v551 = vsel %vm418, %v369, %v401
        %v553 = vrot.slane %v551, 3
        %v556 = vsel %vm406, %v370, %v402
        %v557 = vsel %vm410, %v370, %v402
        %v559 = vrot.slane %v557, 1
        %v560 = vsel %vm414, %v370, %v402
        %v562 = vrot.slane %v560, 2
        %v563 = vsel %vm418, %v370, %v402
        %v565 = vrot.slane %v563, 3
        %v568 = vsel %vm406, %v371, %v403
        %v569 = vsel %vm410, %v371, %v403
        %v571 = vrot.slane %v569, 1
        %v572 = vsel %vm414, %v371, %v403
        %v574 = vrot.slane %v572, 2
        %v575 = vsel %vm418, %v371, %v403
        %v577 = vrot.slane %v575, 3
        %v580 = vsel %vm406, %v372, %v404
        %v581 = vsel %vm410, %v372, %v404
        %v583 = vrot.slane %v581, 1
        %v584 = vsel %vm414, %v372, %v404
        %v586 = vrot.slane %v584, 2
        %v587 = vsel %vm418, %v372, %v404
        %v589 = vrot.slane %v587, 3
        %v592 = vsel %vm406, %v373, %v405
        %v593 = vsel %vm410, %v373, %v405
        %v595 = vrot.slane %v593, 1
        %v596 = vsel %vm414, %v373, %v405
        %v598 = vrot.slane %v596, 2
        %v599 = vsel %vm418, %v373, %v405
        %v601 = vrot.slane %v599, 3
        %v666 = vunpack.c.l.bf16 %v409
        %v667 = vunpack.c.l.bf16 %v413
        %v668 = vunpack.c.l.bf16 %v417
        %v669 = vunpack.c.l.bf16 %v421
        %v670 = vunpack.c.l.bf16 %v424
        %v671 = vunpack.c.l.bf16 %v427
        %v672 = vunpack.c.l.bf16 %v430
        %v673 = vunpack.c.l.bf16 %v433
        %v674 = vunpack.c.l.bf16 %v436
        %v675 = vunpack.c.l.bf16 %v439
        %v676 = vunpack.c.l.bf16 %v442
        %v677 = vunpack.c.l.bf16 %v445
        %v678 = vunpack.c.l.bf16 %v448
        %v679 = vunpack.c.l.bf16 %v451
        %v680 = vunpack.c.l.bf16 %v454
        %v681 = vunpack.c.l.bf16 %v457
        %v682 = vunpack.c.l.bf16 %v460
        %v683 = vunpack.c.l.bf16 %v463
        %v684 = vunpack.c.l.bf16 %v466
        %v685 = vunpack.c.l.bf16 %v469
        %v686 = vunpack.c.l.bf16 %v472
        %v687 = vunpack.c.l.bf16 %v475
        %v688 = vunpack.c.l.bf16 %v478
        %v689 = vunpack.c.l.bf16 %v481
        %v690 = vunpack.c.l.bf16 %v484
        %v691 = vunpack.c.l.bf16 %v487
        %v692 = vunpack.c.l.bf16 %v490
        %v693 = vunpack.c.l.bf16 %v493
        %v694 = vunpack.c.l.bf16 %v496
        %v695 = vunpack.c.l.bf16 %v499
        %v696 = vunpack.c.l.bf16 %v502
        %v697 = vunpack.c.l.bf16 %v505
        %v698 = vunpack.c.l.bf16 %v508
        %v699 = vunpack.c.l.bf16 %v511
        %v700 = vunpack.c.l.bf16 %v514
        %v701 = vunpack.c.l.bf16 %v517
        %v702 = vunpack.c.l.bf16 %v520
        %v703 = vunpack.c.l.bf16 %v523
        %v704 = vunpack.c.l.bf16 %v526
        %v705 = vunpack.c.l.bf16 %v529
        %v706 = vunpack.c.l.bf16 %v532
        %v707 = vunpack.c.l.bf16 %v535
        %v708 = vunpack.c.l.bf16 %v538
        %v709 = vunpack.c.l.bf16 %v541
        %v710 = vunpack.c.l.bf16 %v544
        %v711 = vunpack.c.l.bf16 %v547
        %v712 = vunpack.c.l.bf16 %v550
        %v713 = vunpack.c.l.bf16 %v553
        %v714 = vunpack.c.l.bf16 %v556
        %v715 = vunpack.c.l.bf16 %v559
        %v716 = vunpack.c.l.bf16 %v562
        %v717 = vunpack.c.l.bf16 %v565
        %v718 = vunpack.c.l.bf16 %v568
        %v719 = vunpack.c.l.bf16 %v571
        %v720 = vunpack.c.l.bf16 %v574
        %v721 = vunpack.c.l.bf16 %v577
        %v722 = vunpack.c.l.bf16 %v580
        %v723 = vunpack.c.l.bf16 %v583
        %v724 = vunpack.c.l.bf16 %v586
        %v725 = vunpack.c.l.bf16 %v589
        %v726 = vunpack.c.l.bf16 %v592
        %v727 = vunpack.c.l.bf16 %v595
        %v728 = vunpack.c.l.bf16 %v598
        %v729 = vunpack.c.l.bf16 %v601
        %v794 = vrot.slane %v666, 7
        %v795 = vrot.slane %v794, 2
        %v796 = vrot.slane %v667, 7
        %v797 = vrot.slane %v796, 2
        %v798 = vrot.slane %v668, 7
        %v799 = vrot.slane %v798, 2
        %v800 = vrot.slane %v669, 7
        %v801 = vrot.slane %v800, 2
        %v802 = vrot.slane %v670, 7
        %v803 = vrot.slane %v802, 2
        %v804 = vrot.slane %v671, 7
        %v805 = vrot.slane %v804, 2
        %v806 = vrot.slane %v672, 7
        %v807 = vrot.slane %v806, 2
        %v808 = vrot.slane %v673, 7
        %v809 = vrot.slane %v808, 2
        %v810 = vrot.slane %v674, 7
        %v811 = vrot.slane %v810, 2
        %v812 = vrot.slane %v675, 7
        %v813 = vrot.slane %v812, 2
        %v814 = vrot.slane %v676, 7
        %v815 = vrot.slane %v814, 2
        %v816 = vrot.slane %v677, 7
        %v817 = vrot.slane %v816, 2
        %v818 = vrot.slane %v678, 7
        %v819 = vrot.slane %v818, 2
        %v820 = vrot.slane %v679, 7
        %v821 = vrot.slane %v820, 2
        %v822 = vrot.slane %v680, 7
        %v823 = vrot.slane %v822, 2
        %v824 = vrot.slane %v681, 7
        %v825 = vrot.slane %v824, 2
        %v826 = vrot.slane %v682, 7
        %v827 = vrot.slane %v826, 2
        %v828 = vrot.slane %v683, 7
        %v829 = vrot.slane %v828, 2
        %v830 = vrot.slane %v684, 7
        %v831 = vrot.slane %v830, 2
        %v832 = vrot.slane %v685, 7
        %v833 = vrot.slane %v832, 2
        %v834 = vrot.slane %v686, 7
        %v835 = vrot.slane %v834, 2
        %v836 = vrot.slane %v687, 7
        %v837 = vrot.slane %v836, 2
        %v838 = vrot.slane %v688, 7
        %v839 = vrot.slane %v838, 2
        %v840 = vrot.slane %v689, 7
        %v841 = vrot.slane %v840, 2
        %v842 = vrot.slane %v690, 7
        %v843 = vrot.slane %v842, 2
        %v844 = vrot.slane %v691, 7
        %v845 = vrot.slane %v844, 2
        %v846 = vrot.slane %v692, 7
        %v847 = vrot.slane %v846, 2
        %v848 = vrot.slane %v693, 7
        %v849 = vrot.slane %v848, 2
        %v850 = vrot.slane %v694, 7
        %v851 = vrot.slane %v850, 2
        %v852 = vrot.slane %v695, 7
        %v853 = vrot.slane %v852, 2
        %v854 = vrot.slane %v696, 7
        %v855 = vrot.slane %v854, 2
        %v856 = vrot.slane %v697, 7
        %v857 = vrot.slane %v856, 2
        %v858 = vrot.slane %v698, 7
        %v859 = vrot.slane %v858, 2
        %v860 = vrot.slane %v699, 7
        %v861 = vrot.slane %v860, 2
        %v862 = vrot.slane %v700, 7
        %v863 = vrot.slane %v862, 2
        %v864 = vrot.slane %v701, 7
        %v865 = vrot.slane %v864, 2
        %v866 = vrot.slane %v702, 7
        %v867 = vrot.slane %v866, 2
        %v868 = vrot.slane %v703, 7
        %v869 = vrot.slane %v868, 2
        %v870 = vrot.slane %v704, 7
        %v871 = vrot.slane %v870, 2
        %v872 = vrot.slane %v705, 7
        %v873 = vrot.slane %v872, 2
        %v874 = vrot.slane %v706, 7
        %v875 = vrot.slane %v874, 2
        %v876 = vrot.slane %v707, 7
        %v877 = vrot.slane %v876, 2
        %v878 = vrot.slane %v708, 7
        %v879 = vrot.slane %v878, 2
        %v880 = vrot.slane %v709, 7
        %v881 = vrot.slane %v880, 2
        %v882 = vrot.slane %v710, 7
        %v883 = vrot.slane %v882, 2
        %v884 = vrot.slane %v711, 7
        %v885 = vrot.slane %v884, 2
        %v886 = vrot.slane %v712, 7
        %v887 = vrot.slane %v886, 2
        %v888 = vrot.slane %v713, 7
        %v889 = vrot.slane %v888, 2
        %v890 = vrot.slane %v714, 7
        %v891 = vrot.slane %v890, 2
        %v892 = vrot.slane %v715, 7
        %v893 = vrot.slane %v892, 2
        %v894 = vrot.slane %v716, 7
        %v895 = vrot.slane %v894, 2
        %v896 = vrot.slane %v717, 7
        %v897 = vrot.slane %v896, 2
        %v898 = vrot.slane %v718, 7
        %v899 = vrot.slane %v898, 2
        %v900 = vrot.slane %v719, 7
        %v901 = vrot.slane %v900, 2
        %v902 = vrot.slane %v720, 7
        %v903 = vrot.slane %v902, 2
        %v904 = vrot.slane %v721, 7
        %v905 = vrot.slane %v904, 2
        %v906 = vrot.slane %v722, 7
        %v907 = vrot.slane %v906, 2
        %v908 = vrot.slane %v723, 7
        %v909 = vrot.slane %v908, 2
        %v910 = vrot.slane %v724, 7
        %v911 = vrot.slane %v910, 2
        %v912 = vrot.slane %v725, 7
        %v913 = vrot.slane %v912, 2
        %v914 = vrot.slane %v726, 7
        %v915 = vrot.slane %v914, 2
        %v916 = vrot.slane %v727, 7
        %v917 = vrot.slane %v916, 2
        %v918 = vrot.slane %v728, 7
        %v919 = vrot.slane %v918, 2
        %v920 = vrot.slane %v729, 7
        %v921 = vrot.slane %v920, 2
        %v986 = vmax.f32 %v666, %v795
        %v987 = vmax.f32 %v667, %v797
        %v988 = vmax.f32 %v668, %v799
        %v989 = vmax.f32 %v669, %v801
        %v990 = vmax.f32 %v670, %v803
        %v991 = vmax.f32 %v671, %v805
        %v992 = vmax.f32 %v672, %v807
        %v993 = vmax.f32 %v673, %v809
        %v994 = vmax.f32 %v674, %v811
        %v995 = vmax.f32 %v675, %v813
        %v996 = vmax.f32 %v676, %v815
        %v997 = vmax.f32 %v677, %v817
        %v998 = vmax.f32 %v678, %v819
        %v999 = vmax.f32 %v679, %v821
        %v1000 = vmax.f32 %v680, %v823
        %v1001 = vmax.f32 %v681, %v825
        %v1002 = vmax.f32 %v682, %v827
        %v1003 = vmax.f32 %v683, %v829
        %v1004 = vmax.f32 %v684, %v831
        %v1005 = vmax.f32 %v685, %v833
        %v1006 = vmax.f32 %v686, %v835
        %v1007 = vmax.f32 %v687, %v837
        %v1008 = vmax.f32 %v688, %v839
        %v1009 = vmax.f32 %v689, %v841
        %v1010 = vmax.f32 %v690, %v843
        %v1011 = vmax.f32 %v691, %v845
        %v1012 = vmax.f32 %v692, %v847
        %v1013 = vmax.f32 %v693, %v849
        %v1014 = vmax.f32 %v694, %v851
        %v1015 = vmax.f32 %v695, %v853
        %v1016 = vmax.f32 %v696, %v855
        %v1017 = vmax.f32 %v697, %v857
        %v1018 = vmax.f32 %v698, %v859
        %v1019 = vmax.f32 %v699, %v861
        %v1020 = vmax.f32 %v700, %v863
        %v1021 = vmax.f32 %v701, %v865
        %v1022 = vmax.f32 %v702, %v867
        %v1023 = vmax.f32 %v703, %v869
        %v1024 = vmax.f32 %v704, %v871
        %v1025 = vmax.f32 %v705, %v873
        %v1026 = vmax.f32 %v706, %v875
        %v1027 = vmax.f32 %v707, %v877
        %v1028 = vmax.f32 %v708, %v879
        %v1029 = vmax.f32 %v709, %v881
        %v1030 = vmax.f32 %v710, %v883
        %v1031 = vmax.f32 %v711, %v885
        %v1032 = vmax.f32 %v712, %v887
        %v1033 = vmax.f32 %v713, %v889
        %v1034 = vmax.f32 %v714, %v891
        %v1035 = vmax.f32 %v715, %v893
        %v1036 = vmax.f32 %v716, %v895
        %v1037 = vmax.f32 %v717, %v897
        %v1038 = vmax.f32 %v718, %v899
        %v1039 = vmax.f32 %v719, %v901
        %v1040 = vmax.f32 %v720, %v903
        %v1041 = vmax.f32 %v721, %v905
        %v1042 = vmax.f32 %v722, %v907
        %v1043 = vmax.f32 %v723, %v909
        %v1044 = vmax.f32 %v724, %v911
        %v1045 = vmax.f32 %v725, %v913
        %v1046 = vmax.f32 %v726, %v915
        %v1047 = vmax.f32 %v727, %v917
        %v1048 = vmax.f32 %v728, %v919
        %v1049 = vmax.f32 %v729, %v921
        %v1050 = vpack.c.bf16 %v986, %v986
        %v1051 = vpack.c.bf16 %v987, %v987
        %v1052 = vpack.c.bf16 %v988, %v988
        %v1053 = vpack.c.bf16 %v989, %v989
        %v1054 = vpack.c.bf16 %v990, %v990
        %v1055 = vpack.c.bf16 %v991, %v991
        %v1056 = vpack.c.bf16 %v992, %v992
        %v1057 = vpack.c.bf16 %v993, %v993
        %v1058 = vpack.c.bf16 %v994, %v994
        %v1059 = vpack.c.bf16 %v995, %v995
        %v1060 = vpack.c.bf16 %v996, %v996
        %v1061 = vpack.c.bf16 %v997, %v997
        %v1062 = vpack.c.bf16 %v998, %v998
        %v1063 = vpack.c.bf16 %v999, %v999
        %v1064 = vpack.c.bf16 %v1000, %v1000
        %v1065 = vpack.c.bf16 %v1001, %v1001
        %v1066 = vpack.c.bf16 %v1002, %v1002
        %v1067 = vpack.c.bf16 %v1003, %v1003
        %v1068 = vpack.c.bf16 %v1004, %v1004
        %v1069 = vpack.c.bf16 %v1005, %v1005
        %v1070 = vpack.c.bf16 %v1006, %v1006
        %v1071 = vpack.c.bf16 %v1007, %v1007
        %v1072 = vpack.c.bf16 %v1008, %v1008
        %v1073 = vpack.c.bf16 %v1009, %v1009
        %v1074 = vpack.c.bf16 %v1010, %v1010
        %v1075 = vpack.c.bf16 %v1011, %v1011
        %v1076 = vpack.c.bf16 %v1012, %v1012
        %v1077 = vpack.c.bf16 %v1013, %v1013
        %v1078 = vpack.c.bf16 %v1014, %v1014
        %v1079 = vpack.c.bf16 %v1015, %v1015
        %v1080 = vpack.c.bf16 %v1016, %v1016
        %v1081 = vpack.c.bf16 %v1017, %v1017
        %v1082 = vpack.c.bf16 %v1018, %v1018
        %v1083 = vpack.c.bf16 %v1019, %v1019
        %v1084 = vpack.c.bf16 %v1020, %v1020
        %v1085 = vpack.c.bf16 %v1021, %v1021
        %v1086 = vpack.c.bf16 %v1022, %v1022
        %v1087 = vpack.c.bf16 %v1023, %v1023
        %v1088 = vpack.c.bf16 %v1024, %v1024
        %v1089 = vpack.c.bf16 %v1025, %v1025
        %v1090 = vpack.c.bf16 %v1026, %v1026
        %v1091 = vpack.c.bf16 %v1027, %v1027
        %v1092 = vpack.c.bf16 %v1028, %v1028
        %v1093 = vpack.c.bf16 %v1029, %v1029
        %v1094 = vpack.c.bf16 %v1030, %v1030
        %v1095 = vpack.c.bf16 %v1031, %v1031
        %v1096 = vpack.c.bf16 %v1032, %v1032
        %v1097 = vpack.c.bf16 %v1033, %v1033
        %v1098 = vpack.c.bf16 %v1034, %v1034
        %v1099 = vpack.c.bf16 %v1035, %v1035
        %v1100 = vpack.c.bf16 %v1036, %v1036
        %v1101 = vpack.c.bf16 %v1037, %v1037
        %v1102 = vpack.c.bf16 %v1038, %v1038
        %v1103 = vpack.c.bf16 %v1039, %v1039
        %v1104 = vpack.c.bf16 %v1040, %v1040
        %v1105 = vpack.c.bf16 %v1041, %v1041
        %v1106 = vpack.c.bf16 %v1042, %v1042
        %v1107 = vpack.c.bf16 %v1043, %v1043
        %v1108 = vpack.c.bf16 %v1044, %v1044
        %v1109 = vpack.c.bf16 %v1045, %v1045
        %v1110 = vpack.c.bf16 %v1046, %v1046
        %v1111 = vpack.c.bf16 %v1047, %v1047
        %v1112 = vpack.c.bf16 %v1048, %v1048
        %v1113 = vpack.c.bf16 %v1049, %v1049
        %v1178 = vunpack.c.l.b16 %v1050
        %v1179 = vunpack.c.l.b16 %v1051
        %v1180 = vunpack.c.l.b16 %v1052
        %v1181 = vunpack.c.l.b16 %v1053
        %v1182 = vunpack.c.l.b16 %v1054
        %v1183 = vunpack.c.l.b16 %v1055
        %v1184 = vunpack.c.l.b16 %v1056
        %v1185 = vunpack.c.l.b16 %v1057
        %v1186 = vunpack.c.l.b16 %v1058
        %v1187 = vunpack.c.l.b16 %v1059
        %v1188 = vunpack.c.l.b16 %v1060
        %v1189 = vunpack.c.l.b16 %v1061
        %v1190 = vunpack.c.l.b16 %v1062
        %v1191 = vunpack.c.l.b16 %v1063
        %v1192 = vunpack.c.l.b16 %v1064
        %v1193 = vunpack.c.l.b16 %v1065
        %v1194 = vunpack.c.l.b16 %v1066
        %v1195 = vunpack.c.l.b16 %v1067
        %v1196 = vunpack.c.l.b16 %v1068
        %v1197 = vunpack.c.l.b16 %v1069
        %v1198 = vunpack.c.l.b16 %v1070
        %v1199 = vunpack.c.l.b16 %v1071
        %v1200 = vunpack.c.l.b16 %v1072
        %v1201 = vunpack.c.l.b16 %v1073
        %v1202 = vunpack.c.l.b16 %v1074
        %v1203 = vunpack.c.l.b16 %v1075
        %v1204 = vunpack.c.l.b16 %v1076
        %v1205 = vunpack.c.l.b16 %v1077
        %v1206 = vunpack.c.l.b16 %v1078
        %v1207 = vunpack.c.l.b16 %v1079
        %v1208 = vunpack.c.l.b16 %v1080
        %v1209 = vunpack.c.l.b16 %v1081
        %v1210 = vunpack.c.l.b16 %v1082
        %v1211 = vunpack.c.l.b16 %v1083
        %v1212 = vunpack.c.l.b16 %v1084
        %v1213 = vunpack.c.l.b16 %v1085
        %v1214 = vunpack.c.l.b16 %v1086
        %v1215 = vunpack.c.l.b16 %v1087
        %v1216 = vunpack.c.l.b16 %v1088
        %v1217 = vunpack.c.l.b16 %v1089
        %v1218 = vunpack.c.l.b16 %v1090
        %v1219 = vunpack.c.l.b16 %v1091
        %v1220 = vunpack.c.l.b16 %v1092
        %v1221 = vunpack.c.l.b16 %v1093
        %v1222 = vunpack.c.l.b16 %v1094
        %v1223 = vunpack.c.l.b16 %v1095
        %v1224 = vunpack.c.l.b16 %v1096
        %v1225 = vunpack.c.l.b16 %v1097
        %v1226 = vunpack.c.l.b16 %v1098
        %v1227 = vunpack.c.l.b16 %v1099
        %v1228 = vunpack.c.l.b16 %v1100
        %v1229 = vunpack.c.l.b16 %v1101
        %v1230 = vunpack.c.l.b16 %v1102
        %v1231 = vunpack.c.l.b16 %v1103
        %v1232 = vunpack.c.l.b16 %v1104
        %v1233 = vunpack.c.l.b16 %v1105
        %v1234 = vunpack.c.l.b16 %v1106
        %v1235 = vunpack.c.l.b16 %v1107
        %v1236 = vunpack.c.l.b16 %v1108
        %v1237 = vunpack.c.l.b16 %v1109
        %v1238 = vunpack.c.l.b16 %v1110
        %v1239 = vunpack.c.l.b16 %v1111
        %v1240 = vunpack.c.l.b16 %v1112
        %v1241 = vunpack.c.l.b16 %v1113
        %v1242 = vpack.c.b16 %v1178, %v1178
        %v1243 = vpack.c.b16 %v1179, %v1179
        %v1244 = vpack.c.b16 %v1180, %v1180
        %v1245 = vpack.c.b16 %v1181, %v1181
        %v1246 = vpack.c.b16 %v1182, %v1182
        %v1247 = vpack.c.b16 %v1183, %v1183
        %v1248 = vpack.c.b16 %v1184, %v1184
        %v1249 = vpack.c.b16 %v1185, %v1185
        %v1250 = vpack.c.b16 %v1186, %v1186
        %v1251 = vpack.c.b16 %v1187, %v1187
        %v1252 = vpack.c.b16 %v1188, %v1188
        %v1253 = vpack.c.b16 %v1189, %v1189
        %v1254 = vpack.c.b16 %v1190, %v1190
        %v1255 = vpack.c.b16 %v1191, %v1191
        %v1256 = vpack.c.b16 %v1192, %v1192
        %v1257 = vpack.c.b16 %v1193, %v1193
        %v1258 = vpack.c.b16 %v1194, %v1194
        %v1259 = vpack.c.b16 %v1195, %v1195
        %v1260 = vpack.c.b16 %v1196, %v1196
        %v1261 = vpack.c.b16 %v1197, %v1197
        %v1262 = vpack.c.b16 %v1198, %v1198
        %v1263 = vpack.c.b16 %v1199, %v1199
        %v1264 = vpack.c.b16 %v1200, %v1200
        %v1265 = vpack.c.b16 %v1201, %v1201
        %v1266 = vpack.c.b16 %v1202, %v1202
        %v1267 = vpack.c.b16 %v1203, %v1203
        %v1268 = vpack.c.b16 %v1204, %v1204
        %v1269 = vpack.c.b16 %v1205, %v1205
        %v1270 = vpack.c.b16 %v1206, %v1206
        %v1271 = vpack.c.b16 %v1207, %v1207
        %v1272 = vpack.c.b16 %v1208, %v1208
        %v1273 = vpack.c.b16 %v1209, %v1209
        %v1274 = vpack.c.b16 %v1210, %v1210
        %v1275 = vpack.c.b16 %v1211, %v1211
        %v1276 = vpack.c.b16 %v1212, %v1212
        %v1277 = vpack.c.b16 %v1213, %v1213
        %v1278 = vpack.c.b16 %v1214, %v1214
        %v1279 = vpack.c.b16 %v1215, %v1215
        %v1280 = vpack.c.b16 %v1216, %v1216
        %v1281 = vpack.c.b16 %v1217, %v1217
        %v1282 = vpack.c.b16 %v1218, %v1218
        %v1283 = vpack.c.b16 %v1219, %v1219
        %v1284 = vpack.c.b16 %v1220, %v1220
        %v1285 = vpack.c.b16 %v1221, %v1221
        %v1286 = vpack.c.b16 %v1222, %v1222
        %v1287 = vpack.c.b16 %v1223, %v1223
        %v1288 = vpack.c.b16 %v1224, %v1224
        %v1289 = vpack.c.b16 %v1225, %v1225
        %v1290 = vpack.c.b16 %v1226, %v1226
        %v1291 = vpack.c.b16 %v1227, %v1227
        %v1292 = vpack.c.b16 %v1228, %v1228
        %v1293 = vpack.c.b16 %v1229, %v1229
        %v1294 = vpack.c.b16 %v1230, %v1230
        %v1295 = vpack.c.b16 %v1231, %v1231
        %v1296 = vpack.c.b16 %v1232, %v1232
        %v1297 = vpack.c.b16 %v1233, %v1233
        %v1298 = vpack.c.b16 %v1234, %v1234
        %v1299 = vpack.c.b16 %v1235, %v1235
        %v1300 = vpack.c.b16 %v1236, %v1236
        %v1301 = vpack.c.b16 %v1237, %v1237
        %v1302 = vpack.c.b16 %v1238, %v1238
        %v1303 = vpack.c.b16 %v1239, %v1239
        %v1304 = vpack.c.b16 %v1240, %v1240
        %v1305 = vpack.c.b16 %v1241, %v1241
        %v1306 = vunpack.c.l.b16 %v1242
        %v1307 = vunpack.c.l.b16 %v1243
        %v1308 = vunpack.c.l.b16 %v1244
        %v1309 = vunpack.c.l.b16 %v1245
        %v1310 = vunpack.c.l.b16 %v1246
        %v1311 = vunpack.c.l.b16 %v1247
        %v1312 = vunpack.c.l.b16 %v1248
        %v1313 = vunpack.c.l.b16 %v1249
        %v1314 = vunpack.c.l.b16 %v1250
        %v1315 = vunpack.c.l.b16 %v1251
        %v1316 = vunpack.c.l.b16 %v1252
        %v1317 = vunpack.c.l.b16 %v1253
        %v1318 = vunpack.c.l.b16 %v1254
        %v1319 = vunpack.c.l.b16 %v1255
        %v1320 = vunpack.c.l.b16 %v1256
        %v1321 = vunpack.c.l.b16 %v1257
        %v1322 = vunpack.c.l.b16 %v1258
        %v1323 = vunpack.c.l.b16 %v1259
        %v1324 = vunpack.c.l.b16 %v1260
        %v1325 = vunpack.c.l.b16 %v1261
        %v1326 = vunpack.c.l.b16 %v1262
        %v1327 = vunpack.c.l.b16 %v1263
        %v1328 = vunpack.c.l.b16 %v1264
        %v1329 = vunpack.c.l.b16 %v1265
        %v1330 = vunpack.c.l.b16 %v1266
        %v1331 = vunpack.c.l.b16 %v1267
        %v1332 = vunpack.c.l.b16 %v1268
        %v1333 = vunpack.c.l.b16 %v1269
        %v1334 = vunpack.c.l.b16 %v1270
        %v1335 = vunpack.c.l.b16 %v1271
        %v1336 = vunpack.c.l.b16 %v1272
        %v1337 = vunpack.c.l.b16 %v1273
        %v1338 = vunpack.c.l.b16 %v1274
        %v1339 = vunpack.c.l.b16 %v1275
        %v1340 = vunpack.c.l.b16 %v1276
        %v1341 = vunpack.c.l.b16 %v1277
        %v1342 = vunpack.c.l.b16 %v1278
        %v1343 = vunpack.c.l.b16 %v1279
        %v1344 = vunpack.c.l.b16 %v1280
        %v1345 = vunpack.c.l.b16 %v1281
        %v1346 = vunpack.c.l.b16 %v1282
        %v1347 = vunpack.c.l.b16 %v1283
        %v1348 = vunpack.c.l.b16 %v1284
        %v1349 = vunpack.c.l.b16 %v1285
        %v1350 = vunpack.c.l.b16 %v1286
        %v1351 = vunpack.c.l.b16 %v1287
        %v1352 = vunpack.c.l.b16 %v1288
        %v1353 = vunpack.c.l.b16 %v1289
        %v1354 = vunpack.c.l.b16 %v1290
        %v1355 = vunpack.c.l.b16 %v1291
        %v1356 = vunpack.c.l.b16 %v1292
        %v1357 = vunpack.c.l.b16 %v1293
        %v1358 = vunpack.c.l.b16 %v1294
        %v1359 = vunpack.c.l.b16 %v1295
        %v1360 = vunpack.c.l.b16 %v1296
        %v1361 = vunpack.c.l.b16 %v1297
        %v1362 = vunpack.c.l.b16 %v1298
        %v1363 = vunpack.c.l.b16 %v1299
        %v1364 = vunpack.c.l.b16 %v1300
        %v1365 = vunpack.c.l.b16 %v1301
        %v1366 = vunpack.c.l.b16 %v1302
        %v1367 = vunpack.c.l.b16 %v1303
        %v1368 = vunpack.c.l.b16 %v1304
        %v1369 = vunpack.c.l.b16 %v1305
        %v1370 = vrot.slane %v1307, 7
        %v1371 = vsel %vm410, %v1370, %v1306
        %v1372 = vrot.slane %v1308, 6
        %v1373 = vsel %vm414, %v1372, %v1371
        %v1374 = vrot.slane %v1309, 5
        %v1375 = vsel %vm418, %v1374, %v1373
        %v1376 = vrot.slane %v1310, 4
        %vm1377 = vcmask 1044484
        %v1378 = vsel %vm1377, %v1376, %v1375
        %v1379 = vrot.slane %v1311, 3
        %vm1380 = vcmask 1045509
        %v1381 = vsel %vm1380, %v1379, %v1378
        %v1382 = vrot.slane %v1312, 2
        %vm1383 = vcmask 1046534
        %v1384 = vsel %vm1383, %v1382, %v1381
        %v1385 = vrot.slane %v1313, 1
        %vm1386 = vcmask 1047559
        %v1387 = vsel %vm1386, %v1385, %v1384
        %v1388 = vrot.slane %v1315, 7
        %v1389 = vsel %vm410, %v1388, %v1314
        %v1390 = vrot.slane %v1316, 6
        %v1391 = vsel %vm414, %v1390, %v1389
        %v1392 = vrot.slane %v1317, 5
        %v1393 = vsel %vm418, %v1392, %v1391
        %v1394 = vrot.slane %v1318, 4
        %v1395 = vsel %vm1377, %v1394, %v1393
        %v1396 = vrot.slane %v1319, 3
        %v1397 = vsel %vm1380, %v1396, %v1395
        %v1398 = vrot.slane %v1320, 2
        %v1399 = vsel %vm1383, %v1398, %v1397
        %v1400 = vrot.slane %v1321, 1
        %v1401 = vsel %vm1386, %v1400, %v1399
        %v1402 = vrot.slane %v1323, 7
        %v1403 = vsel %vm410, %v1402, %v1322
        %v1404 = vrot.slane %v1324, 6
        %v1405 = vsel %vm414, %v1404, %v1403
        %v1406 = vrot.slane %v1325, 5
        %v1407 = vsel %vm418, %v1406, %v1405
        %v1408 = vrot.slane %v1326, 4
        %v1409 = vsel %vm1377, %v1408, %v1407
        %v1410 = vrot.slane %v1327, 3
        %v1411 = vsel %vm1380, %v1410, %v1409
        %v1412 = vrot.slane %v1328, 2
        %v1413 = vsel %vm1383, %v1412, %v1411
        %v1414 = vrot.slane %v1329, 1
        %v1415 = vsel %vm1386, %v1414, %v1413
        %v1416 = vrot.slane %v1331, 7
        %v1417 = vsel %vm410, %v1416, %v1330
        %v1418 = vrot.slane %v1332, 6
        %v1419 = vsel %vm414, %v1418, %v1417
        %v1420 = vrot.slane %v1333, 5
        %v1421 = vsel %vm418, %v1420, %v1419
        %v1422 = vrot.slane %v1334, 4
        %v1423 = vsel %vm1377, %v1422, %v1421
        %v1424 = vrot.slane %v1335, 3
        %v1425 = vsel %vm1380, %v1424, %v1423
        %v1426 = vrot.slane %v1336, 2
        %v1427 = vsel %vm1383, %v1426, %v1425
        %v1428 = vrot.slane %v1337, 1
        %v1429 = vsel %vm1386, %v1428, %v1427
        %v1430 = vrot.slane %v1339, 7
        %v1431 = vsel %vm410, %v1430, %v1338
        %v1432 = vrot.slane %v1340, 6
        %v1433 = vsel %vm414, %v1432, %v1431
        %v1434 = vrot.slane %v1341, 5
        %v1435 = vsel %vm418, %v1434, %v1433
        %v1436 = vrot.slane %v1342, 4
        %v1437 = vsel %vm1377, %v1436, %v1435
        %v1438 = vrot.slane %v1343, 3
        %v1439 = vsel %vm1380, %v1438, %v1437
        %v1440 = vrot.slane %v1344, 2
        %v1441 = vsel %vm1383, %v1440, %v1439
        %v1442 = vrot.slane %v1345, 1
        %v1443 = vsel %vm1386, %v1442, %v1441
        %v1444 = vrot.slane %v1347, 7
        %v1445 = vsel %vm410, %v1444, %v1346
        %v1446 = vrot.slane %v1348, 6
        %v1447 = vsel %vm414, %v1446, %v1445
        %v1448 = vrot.slane %v1349, 5
        %v1449 = vsel %vm418, %v1448, %v1447
        %v1450 = vrot.slane %v1350, 4
        %v1451 = vsel %vm1377, %v1450, %v1449
        %v1452 = vrot.slane %v1351, 3
        %v1453 = vsel %vm1380, %v1452, %v1451
        %v1454 = vrot.slane %v1352, 2
        %v1455 = vsel %vm1383, %v1454, %v1453
        %v1456 = vrot.slane %v1353, 1
        %v1457 = vsel %vm1386, %v1456, %v1455
        %v1458 = vrot.slane %v1355, 7
        %v1459 = vsel %vm410, %v1458, %v1354
        %v1460 = vrot.slane %v1356, 6
        %v1461 = vsel %vm414, %v1460, %v1459
        %v1462 = vrot.slane %v1357, 5
        %v1463 = vsel %vm418, %v1462, %v1461
        %v1464 = vrot.slane %v1358, 4
        %v1465 = vsel %vm1377, %v1464, %v1463
        %v1466 = vrot.slane %v1359, 3
        %v1467 = vsel %vm1380, %v1466, %v1465
        %v1468 = vrot.slane %v1360, 2
        %v1469 = vsel %vm1383, %v1468, %v1467
        %v1470 = vrot.slane %v1361, 1
        %v1471 = vsel %vm1386, %v1470, %v1469
        %v1472 = vrot.slane %v1363, 7
        %v1473 = vsel %vm410, %v1472, %v1362
        %v1474 = vrot.slane %v1364, 6
        %v1475 = vsel %vm414, %v1474, %v1473
        %v1476 = vrot.slane %v1365, 5
        %v1477 = vsel %vm418, %v1476, %v1475
        %v1478 = vrot.slane %v1366, 4
        %v1479 = vsel %vm1377, %v1478, %v1477
        %v1480 = vrot.slane %v1367, 3
        %v1481 = vsel %vm1380, %v1480, %v1479
        %v1482 = vrot.slane %v1368, 2
        %v1483 = vsel %vm1383, %v1482, %v1481
        %v1484 = vrot.slane %v1369, 1
        %v1485 = vsel %vm1386, %v1484, %v1483
        %v1486 = vpack.c.b16 %v1387, %v1387
        %v1487 = vpack.c.b16 %v1401, %v1401
        %v1488 = vpack.c.b16 %v1415, %v1415
        %v1489 = vpack.c.b16 %v1429, %v1429
        %v1490 = vpack.c.b16 %v1443, %v1443
        %v1491 = vpack.c.b16 %v1457, %v1457
        %v1492 = vpack.c.b16 %v1471, %v1471
        %v1493 = vpack.c.b16 %v1485, %v1485
        %v1495 = vshrl.u32 0, 16
        %v1497 = vrot.slane %v1495, 7
        %v1498 = vshll.u32 0, 16
        %v1500 = vor.u32 %v1497, %v1498
        %v1502 = vshrl.u32 %v1486, 16
        %v1504 = vrot.slane %v1502, 7
        %v1505 = vshll.u32 %v1486, 16
        %v1507 = vor.u32 %v1504, %v1505
        %v1509 = vshrl.u32 %v1487, 16
        %v1511 = vrot.slane %v1509, 7
        %v1512 = vshll.u32 %v1487, 16
        %v1514 = vor.u32 %v1511, %v1512
        %v1516 = vshrl.u32 %v1488, 16
        %v1518 = vrot.slane %v1516, 7
        %v1519 = vshll.u32 %v1488, 16
        %v1521 = vor.u32 %v1518, %v1519
        %v1523 = vshrl.u32 %v1489, 16
        %v1525 = vrot.slane %v1523, 7
        %v1526 = vshll.u32 %v1489, 16
        %v1528 = vor.u32 %v1525, %v1526
        %v1530 = vshrl.u32 %v1490, 16
        %v1532 = vrot.slane %v1530, 7
        %v1533 = vshll.u32 %v1490, 16
        %v1535 = vor.u32 %v1532, %v1533
        %v1537 = vshrl.u32 %v1491, 16
        %v1539 = vrot.slane %v1537, 7
        %v1540 = vshll.u32 %v1491, 16
        %v1542 = vor.u32 %v1539, %v1540
        %v1544 = vshrl.u32 %v1492, 16
        %v1546 = vrot.slane %v1544, 7
        %v1547 = vshll.u32 %v1492, 16
        %v1549 = vor.u32 %v1546, %v1547
        %v1551 = vshrl.u32 %v1493, 16
        %v1553 = vrot.slane %v1551, 7
        %v1554 = vshll.u32 %v1493, 16
        %v1556 = vor.u32 %v1553, %v1554
        %vm1566 = vcmask 1040384
        %vm1567 = vsmask.f32 256
        %vm1568 = vmand %vm1566, %vm1567
        %v1569 = vsel %vm1568, 0, %v1500
        %v1570 = vsel %vm1568, 0, %v1507
        %v1571 = vsel %vm1568, 0, %v1514
        %v1572 = vsel %vm1568, 0, %v1521
        %v1573 = vsel %vm1568, 0, %v1528
        %v1574 = vsel %vm1568, 0, %v1535
        %v1575 = vsel %vm1568, 0, %v1542
        %v1576 = vsel %vm1568, 0, %v1549
        %v1577 = vsel %vm1568, 0, %v1556
        %v1578 = vrot.slane %v1498, 1
        %v1579 = vor.u32 %v1495, %v1578
        %v1580 = vrot.slane %v1505, 1
        %v1581 = vor.u32 %v1502, %v1580
        %v1582 = vrot.slane %v1512, 1
        %v1583 = vor.u32 %v1509, %v1582
        %v1584 = vrot.slane %v1519, 1
        %v1585 = vor.u32 %v1516, %v1584
        %v1586 = vrot.slane %v1526, 1
        %v1587 = vor.u32 %v1523, %v1586
        %v1588 = vrot.slane %v1533, 1
        %v1589 = vor.u32 %v1530, %v1588
        %v1590 = vrot.slane %v1540, 1
        %v1591 = vor.u32 %v1537, %v1590
        %v1592 = vrot.slane %v1547, 1
        %v1593 = vor.u32 %v1544, %v1592
        %v1594 = vrot.slane %v1554, 1
        %v1595 = vor.u32 %v1551, %v1594
        %vm1605 = vcmask 1043456
        %vm1606 = vsmask.f32 3328
        %vm1607 = vmand %vm1605, %vm1606
        %v1608 = vsel %vm1607, %v1579, 0
        %v1609 = vsel %vm1607, %v1581, 0
        %v1610 = vsel %vm1607, %v1583, 0
        %v1611 = vsel %vm1607, %v1585, 0
        %v1612 = vsel %vm1607, %v1587, 0
        %v1613 = vsel %vm1607, %v1589, 0
        %v1614 = vsel %vm1607, %v1591, 0
        %v1615 = vsel %vm1607, %v1593, 0
        %v1616 = vsel %vm1607, %v1595, 0
        %1618 = vrot.lane.b32.xlu0 0, 4
        %v1619 = vpop.permute.xlu0 %1618
        %1620 = vrot.lane.b32.xlu0 %v1486, 4
        %v1621 = vpop.permute.xlu0 %1620
        %1622 = vrot.lane.b32.xlu0 %v1487, 4
        %v1623 = vpop.permute.xlu0 %1622
        %1624 = vrot.lane.b32.xlu0 %v1488, 4
        %v1625 = vpop.permute.xlu0 %1624
        %1626 = vrot.lane.b32.xlu0 %v1489, 4
        %v1627 = vpop.permute.xlu0 %1626
        %1628 = vrot.lane.b32.xlu0 %v1490, 4
        %v1629 = vpop.permute.xlu0 %1628
        %1630 = vrot.lane.b32.xlu0 %v1491, 4
        %v1631 = vpop.permute.xlu0 %1630
        %1632 = vrot.lane.b32.xlu0 %v1492, 4
        %v1633 = vpop.permute.xlu0 %1632
        %1634 = vrot.lane.b32.xlu0 %v1493, 4
        %v1635 = vpop.permute.xlu0 %1634
        %1645 = vrot.lane.b32.xlu0 %v1608, 8
        %v1646 = vpop.permute.xlu0 %1645
        %1647 = vrot.lane.b32.xlu0 %v1609, 8
        %v1648 = vpop.permute.xlu0 %1647
        %1649 = vrot.lane.b32.xlu0 %v1610, 8
        %v1650 = vpop.permute.xlu0 %1649
        %1651 = vrot.lane.b32.xlu0 %v1611, 8
        %v1652 = vpop.permute.xlu0 %1651
        %1653 = vrot.lane.b32.xlu0 %v1612, 8
        %v1654 = vpop.permute.xlu0 %1653
        %1655 = vrot.lane.b32.xlu0 %v1613, 8
        %v1656 = vpop.permute.xlu0 %1655
        %1657 = vrot.lane.b32.xlu0 %v1614, 8
        %v1658 = vpop.permute.xlu0 %1657
        %1659 = vrot.lane.b32.xlu0 %v1615, 8
        %v1660 = vpop.permute.xlu0 %1659
        %1661 = vrot.lane.b32.xlu0 %v1616, 8
        %v1662 = vpop.permute.xlu0 %1661
        %vm1663 = vcmask 31744
        %v1666 = vsel %vm1663, %v1569, %v1619
        %v1669 = vsel %vm1663, %v1570, %v1621
        %v1672 = vsel %vm1663, %v1571, %v1623
        %v1675 = vsel %vm1663, %v1572, %v1625
        %v1678 = vsel %vm1663, %v1573, %v1627
        %v1681 = vsel %vm1663, %v1574, %v1629
        %v1684 = vsel %vm1663, %v1575, %v1631
        %v1687 = vsel %vm1663, %v1576, %v1633
        %v1690 = vsel %vm1663, %v1577, %v1635
        %vm1691 = vcmask 64512
        %v1693 = vsel %vm1691, %v1666, %v1646
        %v1695 = vsel %vm1691, %v1669, %v1648
        %v1697 = vsel %vm1691, %v1672, %v1650
        %v1699 = vsel %vm1691, %v1675, %v1652
        %v1701 = vsel %vm1691, %v1678, %v1654
        %v1703 = vsel %vm1691, %v1681, %v1656
        %v1705 = vsel %vm1691, %v1684, %v1658
        %v1707 = vsel %vm1691, %v1687, %v1660
        %v1709 = vsel %vm1691, %v1690, %v1662
        %v1710 = vld [vmem:[%s1] sm:$0xf]
        %v1711 = vld [vmem:[%s1 + $0x4] sm:$0x3]
        %s1712 = scalar_lea.vmem %s1, 8
        %v1713 = vld [vmem:[%s1712] sm:$0xf]
        %v1714 = vld [vmem:[%s1712 + $0x4] sm:$0x3]
        %v1723 = vunpack.c.l.b16 %v1695
        %v1724 = vunpack.c.l.b16 %v1697
        %v1725 = vunpack.c.l.b16 %v1699
        %v1726 = vunpack.c.l.b16 %v1701
        %v1727 = vunpack.c.l.b16 %v1703
        %v1728 = vunpack.c.l.b16 %v1705
        %v1729 = vunpack.c.l.b16 %v1707
        %v1730 = vunpack.c.l.b16 %v1709
        %v1731 = vpack.c.b16 %v1724, %v1723
        %v1732 = vpack.c.b16 %v1726, %v1725
        %v1733 = vpack.c.b16 %v1728, %v1727
        %v1734 = vpack.c.b16 %v1730, %v1729
        %v1737 = vunpack.c.l.b16 %v1713
        %v1738 = vunpack.c.l.b16 %v1714
        %v1739 = vpack.c.b16 %v1738, %v1737
        %vm1740 = vcmask 97280
        %v1742 = vsel %vm1740, %v1731, 0
        %v1745 = vsel %vm1740, %v1732, 0
        %v1748 = vsel %vm1740, %v1733, 0
        %v1751 = vsel %vm1740, %v1734, 0
        %vm1753 = vcmask 1045504
        %v1755 = vsel %vm1753, %v1739, 0
        %1757 = vmatpush.bf16.msra.mxu0 0
        %1758 = vmatpush.bf16.msra.mxu0 0
        %1759 = vmatpush.bf16.msra.mxu0 0
        %1760 = vmatpush.bf16.msra.mxu0 0
        %1761 = vmatpush.bf16.msra.mxu0 0
        %1762 = vmatpush.bf16.msra.mxu0 0
        %1763 = vmatpush.bf16.msra.mxu0 0
        %1764 = vmatpush.bf16.msra.mxu0 %v1755
        %1765 = vmatmul.bf16.gmra.mxu0 %v1742
        %v1766 = vpop.f32.mrf.mxu0
        %v1767 = vadd.f32 0.0, %v1766
        %v1768 = vpop.f32.mrf.mxu0
        %v1769 = vadd.f32 0.0, %v1768
        %1770 = vmatmul.bf16.gmra.mxu0 %v1745
        %v1771 = vpop.f32.mrf.mxu0
        %v1772 = vadd.f32 0.0, %v1771
        %v1773 = vpop.f32.mrf.mxu0
        %v1774 = vadd.f32 0.0, %v1773
        %1775 = vmatmul.bf16.gmra.mxu0 %v1748
        %v1776 = vpop.f32.mrf.mxu0
        %v1777 = vadd.f32 0.0, %v1776
        %v1778 = vpop.f32.mrf.mxu0
        %v1779 = vadd.f32 0.0, %v1778
        %1780 = vmatmul.bf16.gmra.mxu0 %v1751
        %v1781 = vpop.f32.mrf.mxu0
        %v1782 = vadd.f32 0.0, %v1781
        %v1783 = vpop.f32.mrf.mxu0
        %v1784 = vadd.f32 0.0, %v1783
        %1785 = vdwg.mxu0
        %s1786 = scalar_lea.vmem %s1, 16
        %v1787 = vld [vmem:[%s1786] sm:$0xf]
        %v1788 = vld [vmem:[%s1786 + $0x4] sm:$0x3]
        %v1790 = vunpack.c.l.b16 %v1693
        %v1791 = vpack.c.b16 %v1725, %v1724
        %v1792 = vpack.c.b16 %v1727, %v1726
        %v1793 = vpack.c.b16 %v1729, %v1728
        %v1794 = vpack.c.b16 %v1790, %v1730
        %v1797 = vunpack.c.l.b16 %v1787
        %v1798 = vunpack.c.l.b16 %v1788
        %v1799 = vpack.c.b16 %v1798, %v1797
        %v1801 = vsel %vm1740, %v1791, 0
        %v1804 = vsel %vm1740, %v1792, 0
        %v1807 = vsel %vm1740, %v1793, 0
        %v1810 = vsel %vm1740, %v1794, 0
        %v1813 = vsel %vm1753, %v1799, 0
        %1815 = vmatpush.bf16.msra.mxu0 0
        %1816 = vmatpush.bf16.msra.mxu0 0
        %1817 = vmatpush.bf16.msra.mxu0 0
        %1818 = vmatpush.bf16.msra.mxu0 0
        %1819 = vmatpush.bf16.msra.mxu0 0
        %1820 = vmatpush.bf16.msra.mxu0 0
        %1821 = vmatpush.bf16.msra.mxu0 0
        %1822 = vmatpush.bf16.msra.mxu0 %v1813
        %1823 = vmatmul.bf16.gmra.mxu0 %v1801
        %v1824 = vpop.f32.mrf.mxu0
        %v1825 = vadd.f32 0.0, %v1824
        %v1826 = vpop.f32.mrf.mxu0
        %v1827 = vadd.f32 0.0, %v1826
        %1828 = vmatmul.bf16.gmra.mxu0 %v1804
        %v1829 = vpop.f32.mrf.mxu0
        %v1830 = vadd.f32 0.0, %v1829
        %v1831 = vpop.f32.mrf.mxu0
        %v1832 = vadd.f32 0.0, %v1831
        %1833 = vmatmul.bf16.gmra.mxu0 %v1807
        %v1834 = vpop.f32.mrf.mxu0
        %v1835 = vadd.f32 0.0, %v1834
        %v1836 = vpop.f32.mrf.mxu0
        %v1837 = vadd.f32 0.0, %v1836
        %1838 = vmatmul.bf16.gmra.mxu0 %v1810
        %v1839 = vpop.f32.mrf.mxu0
        %v1840 = vadd.f32 0.0, %v1839
        %v1841 = vpop.f32.mrf.mxu0
        %v1842 = vadd.f32 0.0, %v1841
        %1843 = vdwg.mxu0
        %v1844 = vpack.c.b16 %v1723, %v1790
        %v1847 = vunpack.c.l.b16 %v1710
        %v1848 = vunpack.c.l.b16 %v1711
        %v1849 = vpack.c.b16 %v1848, %v1847
        %v1851 = vsel %vm1740, %v1844, 0
        %v1854 = vsel %vm1753, %v1849, 0
        %1856 = vmatpush.bf16.msra.mxu0 0
        %1857 = vmatpush.bf16.msra.mxu0 0
        %1858 = vmatpush.bf16.msra.mxu0 0
        %1859 = vmatpush.bf16.msra.mxu0 0
        %1860 = vmatpush.bf16.msra.mxu0 0
        %1861 = vmatpush.bf16.msra.mxu0 0
        %1862 = vmatpush.bf16.msra.mxu0 0
        %1863 = vmatpush.bf16.msra.mxu0 %v1854
        %1864 = vmatmul.bf16.gmra.mxu0 %v1851
        %v1865 = vpop.f32.mrf.mxu0
        %v1866 = vadd.f32 %v1767, %v1865
        %v1867 = vpop.f32.mrf.mxu0
        %v1868 = vadd.f32 %v1769, %v1867
        %1869 = vmatmul.bf16.gmra.mxu0 %v1801
        %v1870 = vpop.f32.mrf.mxu0
        %v1871 = vadd.f32 %v1772, %v1870
        %v1872 = vpop.f32.mrf.mxu0
        %v1873 = vadd.f32 %v1774, %v1872
        %1874 = vmatmul.bf16.gmra.mxu0 %v1804
        %v1875 = vpop.f32.mrf.mxu0
        %v1876 = vadd.f32 %v1777, %v1875
        %v1877 = vpop.f32.mrf.mxu0
        %v1878 = vadd.f32 %v1779, %v1877
        %1879 = vmatmul.bf16.gmra.mxu0 %v1807
        %v1880 = vpop.f32.mrf.mxu0
        %v1881 = vadd.f32 %v1782, %v1880
        %v1882 = vpop.f32.mrf.mxu0
        %v1883 = vadd.f32 %v1784, %v1882
        %1884 = vdwg.mxu0
        %v1885 = vadd.f32 %v1866, %v1825
        %v1886 = vadd.f32 %v1868, %v1827
        %v1887 = vadd.f32 %v1871, %v1830
        %v1888 = vadd.f32 %v1873, %v1832
        %v1889 = vadd.f32 %v1876, %v1835
        %v1890 = vadd.f32 %v1878, %v1837
        %v1891 = vadd.f32 %v1881, %v1840
        %v1892 = vadd.f32 %v1883, %v1842
        %v1893 = vld [vmem:[%s2] sm:$0x1]
        %v1895 = vperm.slane %v1893, 0
        %v1897 = vmul.f32 %v1885, %v1895
        %v1898 = vmul.f32 %v1886, %v1895
        %v1899 = vmul.f32 %v1887, %v1895
        %v1900 = vmul.f32 %v1888, %v1895
        %v1901 = vmul.f32 %v1889, %v1895
        %v1902 = vmul.f32 %v1890, %v1895
        %v1903 = vmul.f32 %v1891, %v1895
        %v1904 = vmul.f32 %v1892, %v1895
        %v1905 = vld [vmem:[%s3] sm:$0x1]
        %v1907 = vperm.slane %v1905, 0
        %v1909 = vadd.f32 %v1897, %v1907
        %v1910 = vadd.f32 %v1898, %v1907
        %v1911 = vadd.f32 %v1899, %v1907
        %v1912 = vadd.f32 %v1900, %v1907
        %v1913 = vadd.f32 %v1901, %v1907
        %v1914 = vadd.f32 %v1902, %v1907
        %v1915 = vadd.f32 %v1903, %v1907
        %v1916 = vadd.f32 %v1904, %v1907
        %v1917 = vmax.f32 %v1909, 0.0
        %v1918 = vmax.f32 %v1910, 0.0
        %v1919 = vmax.f32 %v1911, 0.0
        %v1920 = vmax.f32 %v1912, 0.0
        %v1921 = vmax.f32 %v1913, 0.0
        %v1922 = vmax.f32 %v1914, 0.0
        %v1923 = vmax.f32 %v1915, 0.0
        %v1924 = vmax.f32 %v1916, 0.0
        %v1925 = vpack.c.bf16 %v1917, %v1917
        %v1926 = vpack.c.bf16 %v1918, %v1918
        %v1927 = vpack.c.bf16 %v1919, %v1919
        %v1928 = vpack.c.bf16 %v1920, %v1920
        %v1929 = vpack.c.bf16 %v1921, %v1921
        %v1930 = vpack.c.bf16 %v1922, %v1922
        %v1931 = vpack.c.bf16 %v1923, %v1923
        %v1932 = vpack.c.bf16 %v1924, %v1924
        %v1934 = vshrl.u32 %v1925, 16
        %v1936 = vrot.slane %v1934, 7
        %v1937 = vshll.u32 %v1925, 16
        %v1939 = vor.u32 %v1936, %v1937
        %v1941 = vshrl.u32 %v1926, 16
        %v1943 = vrot.slane %v1941, 7
        %v1944 = vshll.u32 %v1926, 16
        %v1946 = vor.u32 %v1943, %v1944
        %v1948 = vshrl.u32 %v1927, 16
        %v1950 = vrot.slane %v1948, 7
        %v1951 = vshll.u32 %v1927, 16
        %v1953 = vor.u32 %v1950, %v1951
        %v1955 = vshrl.u32 %v1928, 16
        %v1957 = vrot.slane %v1955, 7
        %v1958 = vshll.u32 %v1928, 16
        %v1960 = vor.u32 %v1957, %v1958
        %v1962 = vshrl.u32 %v1929, 16
        %v1964 = vrot.slane %v1962, 7
        %v1965 = vshll.u32 %v1929, 16
        %v1967 = vor.u32 %v1964, %v1965
        %v1969 = vshrl.u32 %v1930, 16
        %v1971 = vrot.slane %v1969, 7
        %v1972 = vshll.u32 %v1930, 16
        %v1974 = vor.u32 %v1971, %v1972
        %v1976 = vshrl.u32 %v1931, 16
        %v1978 = vrot.slane %v1976, 7
        %v1979 = vshll.u32 %v1931, 16
        %v1981 = vor.u32 %v1978, %v1979
        %v1983 = vshrl.u32 %v1932, 16
        %v1985 = vrot.slane %v1983, 7
        %v1986 = vshll.u32 %v1932, 16
        %v1988 = vor.u32 %v1985, %v1986
        %v1997 = vsel %vm1568, 0, %v1939
        %v1998 = vsel %vm1568, 0, %v1946
        %v1999 = vsel %vm1568, 0, %v1953
        %v2000 = vsel %vm1568, 0, %v1960
        %v2001 = vsel %vm1568, 0, %v1967
        %v2002 = vsel %vm1568, 0, %v1974
        %v2003 = vsel %vm1568, 0, %v1981
        %v2004 = vsel %vm1568, 0, %v1988
        %v2005 = vrot.slane %v1937, 1
        %v2006 = vor.u32 %v1934, %v2005
        %v2007 = vrot.slane %v1944, 1
        %v2008 = vor.u32 %v1941, %v2007
        %v2009 = vrot.slane %v1951, 1
        %v2010 = vor.u32 %v1948, %v2009
        %v2011 = vrot.slane %v1958, 1
        %v2012 = vor.u32 %v1955, %v2011
        %v2013 = vrot.slane %v1965, 1
        %v2014 = vor.u32 %v1962, %v2013
        %v2015 = vrot.slane %v1972, 1
        %v2016 = vor.u32 %v1969, %v2015
        %v2017 = vrot.slane %v1979, 1
        %v2018 = vor.u32 %v1976, %v2017
        %v2019 = vrot.slane %v1986, 1
        %v2020 = vor.u32 %v1983, %v2019
        %v2029 = vsel %vm1607, %v2006, 0
        %v2030 = vsel %vm1607, %v2008, 0
        %v2031 = vsel %vm1607, %v2010, 0
        %v2032 = vsel %vm1607, %v2012, 0
        %v2033 = vsel %vm1607, %v2014, 0
        %v2034 = vsel %vm1607, %v2016, 0
        %v2035 = vsel %vm1607, %v2018, 0
        %v2036 = vsel %vm1607, %v2020, 0
        %2045 = vrot.lane.b32.xlu0 0, 8
        %v2046 = vpop.permute.xlu0 %2045
        %2047 = vrot.lane.b32.xlu0 %v1925, 8
        %v2048 = vpop.permute.xlu0 %2047
        %2049 = vrot.lane.b32.xlu0 %v1926, 8
        %v2050 = vpop.permute.xlu0 %2049
        %2051 = vrot.lane.b32.xlu0 %v1927, 8
        %v2052 = vpop.permute.xlu0 %2051
        %2053 = vrot.lane.b32.xlu0 %v1928, 8
        %v2054 = vpop.permute.xlu0 %2053
        %2055 = vrot.lane.b32.xlu0 %v1929, 8
        %v2056 = vpop.permute.xlu0 %2055
        %2057 = vrot.lane.b32.xlu0 %v1930, 8
        %v2058 = vpop.permute.xlu0 %2057
        %2059 = vrot.lane.b32.xlu0 %v1931, 8
        %v2060 = vpop.permute.xlu0 %2059
        %2061 = vrot.lane.b32.xlu0 %v1932, 8
        %v2062 = vpop.permute.xlu0 %2061
        %2071 = vrot.lane.b32.xlu0 %v1608, 16
        %v2072 = vpop.permute.xlu0 %2071
        %2073 = vrot.lane.b32.xlu0 %v2029, 16
        %v2074 = vpop.permute.xlu0 %2073
        %2075 = vrot.lane.b32.xlu0 %v2030, 16
        %v2076 = vpop.permute.xlu0 %2075
        %2077 = vrot.lane.b32.xlu0 %v2031, 16
        %v2078 = vpop.permute.xlu0 %2077
        %2079 = vrot.lane.b32.xlu0 %v2032, 16
        %v2080 = vpop.permute.xlu0 %2079
        %2081 = vrot.lane.b32.xlu0 %v2033, 16
        %v2082 = vpop.permute.xlu0 %2081
        %2083 = vrot.lane.b32.xlu0 %v2034, 16
        %v2084 = vpop.permute.xlu0 %2083
        %2085 = vrot.lane.b32.xlu0 %v2035, 16
        %v2086 = vpop.permute.xlu0 %2085
        %2087 = vrot.lane.b32.xlu0 %v2036, 16
        %v2088 = vpop.permute.xlu0 %2087
        %v2090 = vsel %vm1691, %v1569, %v2046
        %v2093 = vsel %vm1691, %v1997, %v2048
        %v2096 = vsel %vm1691, %v1998, %v2050
        %v2099 = vsel %vm1691, %v1999, %v2052
        %v2102 = vsel %vm1691, %v2000, %v2054
        %v2105 = vsel %vm1691, %v2001, %v2056
        %v2108 = vsel %vm1691, %v2002, %v2058
        %v2111 = vsel %vm1691, %v2003, %v2060
        %v2114 = vsel %vm1691, %v2004, %v2062
        %vm2115 = vcmask 130048
        %v2117 = vsel %vm2115, %v2090, %v2072
        %v2119 = vsel %vm2115, %v2093, %v2074
        %v2121 = vsel %vm2115, %v2096, %v2076
        %v2123 = vsel %vm2115, %v2099, %v2078
        %v2125 = vsel %vm2115, %v2102, %v2080
        %v2127 = vsel %vm2115, %v2105, %v2082
        %v2129 = vsel %vm2115, %v2108, %v2084
        %v2131 = vsel %vm2115, %v2111, %v2086
        %v2133 = vsel %vm2115, %v2114, %v2088
        %v2134 = vld [vmem:[%s4] sm:$0xf]
        %v2135 = vld [vmem:[%s4 + $0x4] sm:$0xf]
        %v2136 = vld [vmem:[%s4 + $0x8] sm:$0xf]
        %s2137 = scalar_lea.vmem %s4, 12
        %v2138 = vld [vmem:[%s2137] sm:$0xf]
        %v2139 = vld [vmem:[%s2137 + $0x4] sm:$0xf]
        %v2140 = vld [vmem:[%s2137 + $0x8] sm:$0xf]
        %v2149 = vunpack.c.l.b16 %v2119
        %v2150 = vunpack.c.l.b16 %v2121
        %v2151 = vunpack.c.l.b16 %v2123
        %v2152 = vunpack.c.l.b16 %v2125
        %v2153 = vunpack.c.l.b16 %v2127
        %v2154 = vunpack.c.l.b16 %v2129
        %v2155 = vunpack.c.l.b16 %v2131
        %v2156 = vunpack.c.l.b16 %v2133
        %v2157 = vpack.c.b16 %v2150, %v2149
        %v2158 = vpack.c.b16 %v2152, %v2151
        %v2159 = vpack.c.b16 %v2154, %v2153
        %v2160 = vpack.c.b16 %v2156, %v2155
        %v2164 = vunpack.c.l.b16 %v2138
        %v2165 = vunpack.c.l.b16 %v2139
        %v2166 = vunpack.c.l.b16 %v2140
        %v2167 = vpack.c.b16 %v2165, %v2164
        %v2168 = vpack.c.b16 %v2166, %v2166
        %vm2170 = vcmask 195584
        %v2172 = vsel %vm2170, %v2157, 0
        %v2175 = vsel %vm2170, %v2158, 0
        %v2178 = vsel %vm2170, %v2159, 0
        %v2181 = vsel %vm2170, %v2160, 0
        %vm2183 = vcmask 1043456
        %v2185 = vsel %vm2183, %v2168, 0
        %2187 = vmatpush.bf16.msra.mxu0 0
        %2188 = vmatpush.bf16.msra.mxu0 0
        %2189 = vmatpush.bf16.msra.mxu0 0
        %2190 = vmatpush.bf16.msra.mxu0 0
        %2191 = vmatpush.bf16.msra.mxu0 0
        %2192 = vmatpush.bf16.msra.mxu0 0
        %2193 = vmatpush.bf16.msra.mxu0 %v2185
        %2194 = vmatpush.bf16.msra.mxu0 %v2167
        %2195 = vmatmul.bf16.gmra.mxu0 %v2172
        %v2196 = vpop.f32.mrf.mxu0
        %v2197 = vadd.f32 0.0, %v2196
        %v2198 = vpop.f32.mrf.mxu0
        %v2199 = vadd.f32 0.0, %v2198
        %2200 = vmatmul.bf16.gmra.mxu0 %v2175
        %v2201 = vpop.f32.mrf.mxu0
        %v2202 = vadd.f32 0.0, %v2201
        %v2203 = vpop.f32.mrf.mxu0
        %v2204 = vadd.f32 0.0, %v2203
        %2205 = vmatmul.bf16.gmra.mxu0 %v2178
        %v2206 = vpop.f32.mrf.mxu0
        %v2207 = vadd.f32 0.0, %v2206
        %v2208 = vpop.f32.mrf.mxu0
        %v2209 = vadd.f32 0.0, %v2208
        %2210 = vmatmul.bf16.gmra.mxu0 %v2181
        %v2211 = vpop.f32.mrf.mxu0
        %v2212 = vadd.f32 0.0, %v2211
        %v2213 = vpop.f32.mrf.mxu0
        %v2214 = vadd.f32 0.0, %v2213
        %2215 = vdwg.mxu0
        %s2216 = scalar_lea.vmem %s4, 24
        %v2217 = vld [vmem:[%s2216] sm:$0xf]
        %v2218 = vld [vmem:[%s2216 + $0x4] sm:$0xf]
        %v2219 = vld [vmem:[%s2216 + $0x8] sm:$0xf]
        %v2221 = vunpack.c.l.b16 %v2117
        %v2222 = vpack.c.b16 %v2151, %v2150
        %v2223 = vpack.c.b16 %v2153, %v2152
        %v2224 = vpack.c.b16 %v2155, %v2154
        %v2225 = vpack.c.b16 %v2221, %v2156
        %v2229 = vunpack.c.l.b16 %v2217
        %v2230 = vunpack.c.l.b16 %v2218
        %v2231 = vunpack.c.l.b16 %v2219
        %v2232 = vpack.c.b16 %v2230, %v2229
        %v2233 = vpack.c.b16 %v2231, %v2231
        %v2236 = vsel %vm2170, %v2222, 0
        %v2239 = vsel %vm2170, %v2223, 0
        %v2242 = vsel %vm2170, %v2224, 0
        %v2245 = vsel %vm2170, %v2225, 0
        %v2248 = vsel %vm2183, %v2233, 0
        %2250 = vmatpush.bf16.msra.mxu0 0
        %2251 = vmatpush.bf16.msra.mxu0 0
        %2252 = vmatpush.bf16.msra.mxu0 0
        %2253 = vmatpush.bf16.msra.mxu0 0
        %2254 = vmatpush.bf16.msra.mxu0 0
        %2255 = vmatpush.bf16.msra.mxu0 0
        %2256 = vmatpush.bf16.msra.mxu0 %v2248
        %2257 = vmatpush.bf16.msra.mxu0 %v2232
        %2258 = vmatmul.bf16.gmra.mxu0 %v2236
        %v2259 = vpop.f32.mrf.mxu0
        %v2260 = vadd.f32 0.0, %v2259
        %v2261 = vpop.f32.mrf.mxu0
        %v2262 = vadd.f32 0.0, %v2261
        %2263 = vmatmul.bf16.gmra.mxu0 %v2239
        %v2264 = vpop.f32.mrf.mxu0
        %v2265 = vadd.f32 0.0, %v2264
        %v2266 = vpop.f32.mrf.mxu0
        %v2267 = vadd.f32 0.0, %v2266
        %2268 = vmatmul.bf16.gmra.mxu0 %v2242
        %v2269 = vpop.f32.mrf.mxu0
        %v2270 = vadd.f32 0.0, %v2269
        %v2271 = vpop.f32.mrf.mxu0
        %v2272 = vadd.f32 0.0, %v2271
        %2273 = vmatmul.bf16.gmra.mxu0 %v2245
        %v2274 = vpop.f32.mrf.mxu0
        %v2275 = vadd.f32 0.0, %v2274
        %v2276 = vpop.f32.mrf.mxu0
        %v2277 = vadd.f32 0.0, %v2276
        %2278 = vdwg.mxu0
        %v2279 = vpack.c.b16 %v2149, %v2221
        %v2283 = vunpack.c.l.b16 %v2134
        %v2284 = vunpack.c.l.b16 %v2135
        %v2285 = vunpack.c.l.b16 %v2136
        %v2286 = vpack.c.b16 %v2284, %v2283
        %v2287 = vpack.c.b16 %v2285, %v2285
        %v2290 = vsel %vm2170, %v2279, 0
        %v2293 = vsel %vm2183, %v2287, 0
        %2295 = vmatpush.bf16.msra.mxu0 0
        %2296 = vmatpush.bf16.msra.mxu0 0
        %2297 = vmatpush.bf16.msra.mxu0 0
        %2298 = vmatpush.bf16.msra.mxu0 0
        %2299 = vmatpush.bf16.msra.mxu0 0
        %2300 = vmatpush.bf16.msra.mxu0 0
        %2301 = vmatpush.bf16.msra.mxu0 %v2293
        %2302 = vmatpush.bf16.msra.mxu0 %v2286
        %2303 = vmatmul.bf16.gmra.mxu0 %v2290
        %v2304 = vpop.f32.mrf.mxu0
        %v2305 = vadd.f32 %v2197, %v2304
        %v2306 = vpop.f32.mrf.mxu0
        %v2307 = vadd.f32 %v2199, %v2306
        %2308 = vmatmul.bf16.gmra.mxu0 %v2236
        %v2309 = vpop.f32.mrf.mxu0
        %v2310 = vadd.f32 %v2202, %v2309
        %v2311 = vpop.f32.mrf.mxu0
        %v2312 = vadd.f32 %v2204, %v2311
        %2313 = vmatmul.bf16.gmra.mxu0 %v2239
        %v2314 = vpop.f32.mrf.mxu0
        %v2315 = vadd.f32 %v2207, %v2314
        %v2316 = vpop.f32.mrf.mxu0
        %v2317 = vadd.f32 %v2209, %v2316
        %2318 = vmatmul.bf16.gmra.mxu0 %v2242
        %v2319 = vpop.f32.mrf.mxu0
        %v2320 = vadd.f32 %v2212, %v2319
        %v2321 = vpop.f32.mrf.mxu0
        %v2322 = vadd.f32 %v2214, %v2321
        %2323 = vdwg.mxu0
        %v2324 = vadd.f32 %v2305, %v2260
        %v2325 = vadd.f32 %v2307, %v2262
        %v2326 = vadd.f32 %v2310, %v2265
        %v2327 = vadd.f32 %v2312, %v2267
        %v2328 = vadd.f32 %v2315, %v2270
        %v2329 = vadd.f32 %v2317, %v2272
        %v2330 = vadd.f32 %v2320, %v2275
        %v2331 = vadd.f32 %v2322, %v2277
        %v2332 = vld [vmem:[%s5] sm:$0x1]
        %v2334 = vperm.slane %v2332, 0
        %v2336 = vmul.f32 %v2324, %v2334
        %v2337 = vmul.f32 %v2325, %v2334
        %v2338 = vmul.f32 %v2326, %v2334
        %v2339 = vmul.f32 %v2327, %v2334
        %v2340 = vmul.f32 %v2328, %v2334
        %v2341 = vmul.f32 %v2329, %v2334
        %v2342 = vmul.f32 %v2330, %v2334
        %v2343 = vmul.f32 %v2331, %v2334
        %v2344 = vld [vmem:[%s6] sm:$0x1]
        %v2346 = vperm.slane %v2344, 0
        %v2348 = vadd.f32 %v2336, %v2346
        %v2349 = vadd.f32 %v2337, %v2346
        %v2350 = vadd.f32 %v2338, %v2346
        %v2351 = vadd.f32 %v2339, %v2346
        %v2352 = vadd.f32 %v2340, %v2346
        %v2353 = vadd.f32 %v2341, %v2346
        %v2354 = vadd.f32 %v2342, %v2346
        %v2355 = vadd.f32 %v2343, %v2346
        %v2356 = vmax.f32 %v2348, 0.0
        %v2357 = vmax.f32 %v2349, 0.0
        %v2358 = vmax.f32 %v2350, 0.0
        %v2359 = vmax.f32 %v2351, 0.0
        %v2360 = vmax.f32 %v2352, 0.0
        %v2361 = vmax.f32 %v2353, 0.0
        %v2362 = vmax.f32 %v2354, 0.0
        %v2363 = vmax.f32 %v2355, 0.0
        %2364 = vst.msk [vmem:[%s271] sm:$0xff] %vm1691, %v2356
        %2365 = vst.msk [vmem:[%s271 + $0x8] sm:$0xff] %vm1691, %v2357
        %2366 = vst.msk [vmem:[%s271 + $0x10] sm:$0xff] %vm1691, %v2358
        %2367 = vst.msk [vmem:[%s271 + $0x18] sm:$0xff] %vm1691, %v2359
        %2368 = vst.msk [vmem:[%s271 + $0x20] sm:$0xff] %vm1691, %v2360
        %2369 = vst.msk [vmem:[%s271 + $0x28] sm:$0xff] %vm1691, %v2361
        %2370 = vst.msk [vmem:[%s271 + $0x30] sm:$0xff] %vm1691, %v2362
        %2371 = vst.msk [vmem:[%s271 + $0x38] sm:$0xff] %vm1691, %v2363
        %s2372 = sand.u32 %s181, 1
        %s2373 = scalar_lea.sflag [#allocation3], %s2372
        %s2374 = sand.u32 %s181, 1
        %s2375 = smul.addr %s2374, 64
        %s2376 = scalar_lea.vmem [#allocation2], %s2375
        // Predicated region
        $region49: #{tpu_custom_call.1} parent=47 // pred_check
          %p2377 = pneg %p191
        $region50: #{tpu_custom_call.1} parent=47 // pred_check_branch
          %2379 = sbr.rel (%p2377) target = $region52
        $region51: #{tpu_custom_call.1} parent=47 // pred_region
          %2381 = vsyncadd %s2373, 0
          %s2382 = smul.addr %s21, 8
          %s2383 = smul.addr %s2382, 8
          %s2384 = scalar_lea.hbm %s7, %s2383
          %s2385 = sshll.u32 %s2376, 4
          %s2386 = int_to_ptr.vmem [resolvable:$true] %s2385
          %s2387 = sshll.u32 %s2384, 4
          %s2388 = int_to_ptr.hbm [resolvable:$true] %s2387
          %2393 = dma.vmem_to_hbm [thread:$0]  %s2386, 1024, %s2388, %s2373, 128, 128, 8
        $region52: #{tpu_custom_call.1} parent=47 // pred_fallthru
          _
      $region48: #{tpu_custom_call.1} parent=5 // pred_fallthru
        _
      %p2394 = scmp.le.s32.totalorder 2, %s16
      // Predicated region
      $region53: #{tpu_custom_call.1} parent=5 // pred_check
        %p2395 = pneg %p2394
      $region54: #{tpu_custom_call.1} parent=5 // pred_check_branch
        %2397 = sbr.rel (%p2395) target = $region56
      $region55: #{tpu_custom_call.1} parent=5 // pred_region
        %s2398 = ssub.s32 %s16, 2
        // Predicated region
        $region57: #{tpu_custom_call.1} parent=55 // pred_check
          %p2399 = pneg %p197
        $region58: #{tpu_custom_call.1} parent=55 // pred_check_branch
          %2401 = sbr.rel (%p2399) target = $region60
        $region59: #{tpu_custom_call.1} parent=55 // pred_region
          %s2402 = sand.u32 %s182, 1
          %s2403 = scalar_lea.sflag [#allocation3], %s2402
          %s2404 = sand.u32 %s182, 1
          %s2405 = smul.addr %s2404, 64
          %s2406 = scalar_lea.vmem [#allocation2], %s2405
          %2408 = dma.done %s2403, 1024
        $region60: #{tpu_custom_call.1} parent=55 // pred_fallthru
          _
      $region56: #{tpu_custom_call.1} parent=5 // pred_fallthru
        _
    $region6: #{tpu_custom_call.1} parent=1 // loop_footer
      %s20 = sadd.s32 1, %s16
    $region7: #{tpu_custom_call.1} parent=1 // loop_footer_branch
      %15 = sbr.rel target = $region3
    $region8: #{tpu_custom_call.1} parent=1 // loop_exit
      _
    %2409 = vsyncpa [#allocation3], 1
    %s2410 = scalar_lea.sflag [#allocation3], 1
    %2411 = vsyncpa %s2410, 1

</llo_original>
